<compile_context>
chip_gen: v7x
topology: tpu7x:2x2x1
jax: 0.10.0
libtpu: 0.0.40
codegen_flags: <defaults>
</compile_context>

<pallas_src>
import math
from functools import partial

import jax
import jax.numpy as jnp
from jax import lax
from jax.experimental import pallas as pl
from jax.experimental.pallas import tpu as pltpu


def _pick_tile(s, pref):
    for t in (pref, 512, 256, 128, 64, 32, 16, 8):
        if t <= s and s % t == 0:
            return t
    return s


# ------------------------ Kernel 1: fused Q / K / V projection -----------------------
def _qkv_proj_kernel(x_ref, w_ref, b_ref, qkv_ref):
    x = x_ref[0].astype(jnp.bfloat16)                                    # (TS, C)
    y = jnp.dot(x, w_ref[...], preferred_element_type=jnp.float32) + b_ref[...]
    qkv_ref[0] = y.astype(qkv_ref.dtype)                                 # (TS, 3*inner)


# ------- Kernel 2: flash attention (heads folded) + output projection + residual -----
def _flash_attn_kernel(x_ref, q_ref, k_ref, v_ref, wo_ref, bo_ref, o_ref,
                       m_s, l_s, acc_s, *,
                       heads, dim_head, inv_rescale, residual):
    ki = pl.program_id(2)
    nk = pl.num_programs(2)

    @pl.when(ki == 0)
    def _():
        m_s[...] = jnp.full_like(m_s, -jnp.inf)
        l_s[...] = jnp.zeros_like(l_s)
        acc_s[...] = jnp.zeros_like(acc_s)

    q_all = q_ref[0]            # (TQ, inner)  bf16, SDPA scale pre-folded
    k_all = k_ref[0]            # (TKV, inner) bf16, lane-dense
    v_all = v_ref[0]            # (TKV, inner) bf16, lane-dense

    # Heads folded into the body: static unrolled loop (no `heads` grid axis).
    for h in range(heads):
        sl = slice(h * dim_head, (h + 1) * dim_head)
        qh = q_all[:, sl]                                               # (TQ, Dh)
        kh = k_all[:, sl]                                               # (TKV, Dh)
        vh = v_all[:, sl]                                               # (TKV, Dh)

        # scores = q @ k^T (contract last dims; no materialized transpose).
        s = lax.dot_general(qh, kh, (((1,), (1,)), ((), ())),
                            preferred_element_type=jnp.float32)         # (TQ, TKV)

        m_prev = m_s[h]                                                 # (TQ, 1)
        m_new = jnp.maximum(m_prev, s.max(axis=-1, keepdims=True))
        alpha = jnp.exp(m_prev - m_new)
        p = jnp.exp(s - m_new)                                          # reuses s
        l_s[h] = alpha * l_s[h] + p.sum(axis=-1, keepdims=True)
        acc_s[h] = alpha * acc_s[h] + jnp.dot(
            p.astype(jnp.bfloat16), vh, preferred_element_type=jnp.float32)
        m_s[h] = m_new

    @pl.when(ki == nk - 1)
    def _():
        parts = []
        for h in range(heads):
            inv_l = pl.reciprocal(l_s[h], approx=True)                  # EUP slot
            parts.append((acc_s[h] * inv_l).astype(jnp.bfloat16))       # (TQ, Dh)
        attn = jnp.concatenate(parts, axis=-1)                          # (TQ, inner)
        # Single full-depth output projection: (TQ, inner) x (inner, C).
        out = jnp.dot(attn, wo_ref[...],
                      preferred_element_type=jnp.float32) + bo_ref[...]
        if residual:
            out = out + x_ref[0]
        if inv_rescale != 1.0:
            out = out * inv_rescale
        o_ref[0] = out.astype(o_ref.dtype)


# -------------------------------------- Wrapper ---------------------------------------
def attention_forward(x_nchw, params, *, heads, dim_head,
                      rescale_output_factor=1.0, residual_connection=True,
                      q_tile=256, kv_tile=256, proj_tile=512):
    """x_nchw: (B, C, H, W) float32. Returns (B, C, H, W)."""
    B, C, H, W = x_nchw.shape
    S = H * W
    inner = heads * dim_head
    assert params["wq"].shape == (C, inner)

    # NCHW -> (B, S, C)   (matches .view(B, C, H*W).transpose(1, 2))
    x_seq = jnp.transpose(x_nchw.reshape(B, C, S), (0, 2, 1))

    ts = _pick_tile(S, proj_tile)
    tq = _pick_tile(S, q_tile)
    tkv = _pick_tile(S, kv_tile)

    # Fold SDPA scale into the Q columns; fuse Q/K/V into one (C, 3*inner) weight so
    # Kernel 1 runs a single lane-dense, full-width MXU matmul per x tile.
    scale = 1.0 / math.sqrt(dim_head)
    w_qkv = jnp.concatenate(
        [params["wq"] * scale, params["wk"], params["wv"]], axis=1
    ).astype(jnp.bfloat16)                                               # (C, 3*inner)
    b_qkv = jnp.concatenate(
        [params["bq"] * scale, params["bk"], params["bv"]], axis=1)      # (1, 3*inner) f32

    qkv_seq = pl.pallas_call(
        _qkv_proj_kernel,
        out_shape=jax.ShapeDtypeStruct((B, S, 3 * inner), jnp.bfloat16),
        grid_spec=pltpu.PrefetchScalarGridSpec(
            num_scalar_prefetch=0,
            grid=(B, S // ts),
            in_specs=[
                pl.BlockSpec((1, ts, C), lambda b, s: (b, s, 0)),         # x tile
                pl.BlockSpec((C, 3 * inner), lambda b, s: (0, 0)),        # w_qkv
                pl.BlockSpec((1, 3 * inner), lambda b, s: (0, 0)),        # b_qkv
            ],
            out_specs=pl.BlockSpec((1, ts, 3 * inner), lambda b, s: (b, s, 0)),
        ),
        compiler_params=pltpu.CompilerParams(
            dimension_semantics=("parallel", "parallel")),
    )(x_seq, w_qkv, b_qkv)

    wo_bf = params["wo"].astype(jnp.bfloat16)                             # (inner, C)
    bo = params["bo"]                                                     # (1, C) f32

    kernel = partial(_flash_attn_kernel,
                     heads=heads, dim_head=dim_head,
                     inv_rescale=1.0 / rescale_output_factor,
                     residual=residual_connection)

    out_seq = pl.pallas_call(
        kernel,
        out_shape=jax.ShapeDtypeStruct((B, S, C), x_seq.dtype),
        grid_spec=pltpu.PrefetchScalarGridSpec(
            num_scalar_prefetch=0,
            grid=(B, S // tq, S // tkv),
            in_specs=[
                pl.BlockSpec((1, tq, C), lambda b, qi, ki: (b, qi, 0)),       # x (residual)
                pl.BlockSpec((1, tq, inner), lambda b, qi, ki: (b, qi, 0)),   # Q slab
                pl.BlockSpec((1, tkv, inner), lambda b, qi, ki: (b, ki, 1)),  # K tile
                pl.BlockSpec((1, tkv, inner), lambda b, qi, ki: (b, ki, 2)),  # V tile
                pl.BlockSpec((inner, C), lambda b, qi, ki: (0, 0)),           # wo
                pl.BlockSpec((1, C), lambda b, qi, ki: (0, 0)),               # bo
            ],
            out_specs=pl.BlockSpec((1, tq, C), lambda b, qi, ki: (b, qi, 0)),
            scratch_shapes=[
                pltpu.VMEM((heads, tq, 1), jnp.float32),          # running max (per head)
                pltpu.VMEM((heads, tq, 1), jnp.float32),          # running sum (per head)
                pltpu.VMEM((heads, tq, dim_head), jnp.float32),   # attention accumulator
            ]),
        compiler_params=pltpu.CompilerParams(
            dimension_semantics=("parallel", "parallel", "arbitrary")),
    )(x_seq, qkv_seq, qkv_seq, qkv_seq, wo_bf, bo)

    # (B, S, C) -> NCHW
    return jnp.transpose(out_seq, (0, 2, 1)).reshape(B, C, H, W)


# -------------------------------- Pure-JAX reference ----------------------------------
def reference_forward(x_nchw, params, *, heads, dim_head,
                      rescale_output_factor=1.0):
    B, C, H, W = x_nchw.shape
    S = H * W
    x = jnp.transpose(x_nchw.reshape(B, C, S), (0, 2, 1))                # (B, S, C)
    q = x @ params["wq"] + params["bq"][0]
    k = x @ params["wk"] + params["bk"][0]
    v = x @ params["wv"] + params["bv"][0]

    def split(t):   # (B, S, H*Dh) -> (B, heads, S, Dh)
        return jnp.transpose(t.reshape(B, S, heads, dim_head), (0, 2, 1, 3))

    qh, kh, vh = split(q), split(k), split(v)
    scores = jnp.einsum("bhqd,bhkd->bhqk", qh, kh) / math.sqrt(dim_head)
    probs = jax.nn.softmax(scores, axis=-1)
    attn = jnp.einsum("bhqk,bhkd->bhqd", probs, vh)
    attn = jnp.transpose(attn, (0, 2, 1, 3)).reshape(B, S, heads * dim_head)
    out = attn @ params["wo"] + params["bo"][0]
    out = (out + x) / rescale_output_factor
    return jnp.transpose(out, (0, 2, 1)).reshape(B, C, H, W)


def init_params(key, query_dim, inner_dim):
    ks = jax.random.split(key, 8)
    s_in = 1.0 / math.sqrt(query_dim)
    s_inner = 1.0 / math.sqrt(inner_dim)
    u = jax.random.uniform
    return {
        "wq": u(ks[0], (query_dim, inner_dim), jnp.float32, -s_in, s_in),
        "bq": u(ks[1], (1, inner_dim), jnp.float32, -s_in, s_in),
        "wk": u(ks[2], (query_dim, inner_dim), jnp.float32, -s_in, s_in),
        "bk": u(ks[3], (1, inner_dim), jnp.float32, -s_in, s_in),
        "wv": u(ks[4], (query_dim, inner_dim), jnp.float32, -s_in, s_in),
        "bv": u(ks[5], (1, inner_dim), jnp.float32, -s_in, s_in),
        "wo": u(ks[6], (inner_dim, query_dim), jnp.float32, -s_inner, s_inner),
        "bo": u(ks[7], (1, query_dim), jnp.float32, -s_inner, s_inner),
    }


if __name__ == "__main__":
    # Lane/MXU-friendly but small config: C = 128 (lane-dense output), S = 32*32 = 1024
    # so the flash grid has multiple q / kv tiles; heads folded into the kernel body.
    B, C, H, W = 2, 128, 32, 32
    heads, dim_head = 4, 32                 # inner_dim = 128
    inner_dim = heads * dim_head

    key = jax.random.PRNGKey(0)
    kx, kp = jax.random.split(key)
    x = jax.random.normal(kx, (B, C, H, W), jnp.float32)
    params = init_params(kp, C, inner_dim)

    out = attention_forward(x, params, heads=heads, dim_head=dim_head)
    out = jax.block_until_ready(out)

    ref = reference_forward(x, params, heads=heads, dim_head=dim_head)
    assert out.shape == (B, C, H, W)
    max_err = float(jnp.max(jnp.abs(out - ref)))
    # bf16 MXU inputs with f32 accumulation -> small tolerance vs the f32 reference.
    assert jnp.allclose(out, ref, atol=2e-2, rtol=2e-2), (
        f"mismatch vs reference, max abs err {max_err}")

    print("KERNEL_OK")
</pallas_src>

<mosaic_0001>
module attributes {stable_mosaic.version = 11 : i64} {
  func.func @_qkv_proj_kernel(%arg0: i32, %arg1: i32, %arg2: memref<1x512x128xf32, #tpu.memory_space<vmem>>, %arg3: memref<128x384xbf16, #tpu.memory_space<vmem>>, %arg4: memref<1x384xf32, #tpu.memory_space<vmem>>, %arg5: memref<1x512x384xbf16, #tpu.memory_space<vmem>>) attributes {dimension_semantics = [#tpu.dimension_semantics<parallel>, #tpu.dimension_semantics<parallel>], iteration_bounds = array<i64: 2, 2>, scalar_prefetch = 0 : i64, scratch_operands = 0 : i64, tpu.core_type = #tpu.core_type<tc>, window_params = [{transform_indices = @transform_0, window_bounds = array<i64: 1, 512, 128>}, {pipeline_mode = #tpu.pipeline_mode<synchronous>, transform_indices = @transform_1, window_bounds = array<i64: 128, 384>}, {pipeline_mode = #tpu.pipeline_mode<synchronous>, transform_indices = @transform_2, window_bounds = array<i64: 1, 384>}, {transform_indices = @transform_3, window_bounds = array<i64: 1, 512, 384>}]} {
    %c0 = arith.constant 0 : index
    %c0_0 = arith.constant 0 : index
    %c0_1 = arith.constant 0 : index
    %0 = vector.load %arg2[%c0, %c0_0, %c0_1] : memref<1x512x128xf32, #tpu.memory_space<vmem>>, vector<1x512x128xf32>
    %1 = vector.shape_cast %0 : vector<1x512x128xf32> to vector<512x128xf32>
    %2 = arith.truncf %1 : vector<512x128xf32> to vector<512x128xbf16>
    %c0_2 = arith.constant 0 : index
    %c0_3 = arith.constant 0 : index
    %3 = vector.load %arg3[%c0_2, %c0_3] : memref<128x384xbf16, #tpu.memory_space<vmem>>, vector<128x384xbf16>
    %cst = arith.constant dense<0.000000e+00> : vector<512x384xf32>
    %4 = tpu.matmul %2, %3, %cst {dimension_numbers = #tpu.dot_dimension_numbers<[1], [0], [0], [1], [0, 0, 1, 1], [], []>} : vector<512x128xbf16>, vector<128x384xbf16>, vector<512x384xf32> -> vector<512x384xf32>
    %c0_4 = arith.constant 0 : index
    %c0_5 = arith.constant 0 : index
    %5 = vector.load %arg4[%c0_4, %c0_5] : memref<1x384xf32, #tpu.memory_space<vmem>>, vector<1x384xf32>
    %6 = vector.broadcast %5 : vector<1x384xf32> to vector<512x384xf32>
    %7 = arith.addf %4, %6 : vector<512x384xf32>
    %8 = arith.truncf %7 : vector<512x384xf32> to vector<512x384xbf16>
    %c0_6 = arith.constant 0 : index
    %c0_7 = arith.constant 0 : index
    %c0_8 = arith.constant 0 : index
    %9 = vector.load %arg5[%c0_6, %c0_7, %c0_8] : memref<1x512x384xbf16, #tpu.memory_space<vmem>>, vector<1x512x384xbf16>
    %10 = vector.shape_cast %9 : vector<1x512x384xbf16> to vector<512x384xbf16>
    %11 = vector.shape_cast %8 : vector<512x384xbf16> to vector<1x512x384xbf16>
    tpu.vector_store %arg5[%c0_6, %c0_7, %c0_8], %11 {strides = array<i32>} : memref<1x512x384xbf16, #tpu.memory_space<vmem>>, vector<1x512x384xbf16>,
    return
  }
  func.func @transform_0(%arg0: i32, %arg1: i32) -> (i32, i32, i32) {
    %c0_i32 = arith.constant 0 : i32
    %c0_i32_0 = arith.constant 0 : i32
    return %arg0, %arg1, %c0_i32 : i32, i32, i32
  }
  func.func @transform_1(%arg0: i32, %arg1: i32) -> (i32, i32) {
    %c0_i32 = arith.constant 0 : i32
    %c0_i32_0 = arith.constant 0 : i32
    %c0_i32_1 = arith.constant 0 : i32
    return %c0_i32, %c0_i32_0 : i32, i32
  }
  func.func @transform_2(%arg0: i32, %arg1: i32) -> (i32, i32) {
    %c0_i32 = arith.constant 0 : i32
    %c0_i32_0 = arith.constant 0 : i32
    %c0_i32_1 = arith.constant 0 : i32
    return %c0_i32, %c0_i32_0 : i32, i32
  }
  func.func @transform_3(%arg0: i32, %arg1: i32) -> (i32, i32, i32) {
    %c0_i32 = arith.constant 0 : i32
    %c0_i32_0 = arith.constant 0 : i32
    return %arg0, %arg1, %c0_i32 : i32, i32, i32
  }
}

</mosaic_0001>

<llo_original>
// kernel: tpu_custom_call.1
$region0: #{tpu_custom_call.1}
  #allocation0 [shape = 'u32[]', space=smem, size = 0x4, offset = 0x4, fixed_abs, tag = 'smem constant byte address 0x4 - core index']
  #allocation1 [shape = 'u32[144,128]{1,0:T(1,128)}', space=vmem, size = 0x12000, scoped, tag = 'internal scratch']
  %s0 = inlined_call_operand.hbm [shape: f32[2,1024,128], index: 0, kind: input, shape index: {}]
  %s1 = inlined_call_operand.hbm [shape: bf16[128,384], index: 1, kind: input, shape index: {}]
  %s2 = inlined_call_operand.hbm [shape: f32[1,384], index: 2, kind: input, shape index: {}]
  %s3 = inlined_call_operand.hbm [shape: bf16[2,1024,384], index: 3, kind: output, shape index: {}]
  %s4 = sld [smem:[#allocation0]]
  $region57: #{tpu_custom_call.1} parent=0
    _
  %s6 = ssub.s32 1, %s4
  %s7 = scalar_select 0, %s6, %s4
  $region1: #{tpu_custom_call.1} parent=0
    #allocation2 [shape = 'u8[524288]{0}', space=vmem, size = 0x80000, scoped, tag = 'input window, operand 0']
    #allocation3 [shape = 's32[2]{0}', space=sflag, size = 0x8, scoped, tag = 'scoped memory for tpu_custom_call.1']
    #allocation4 [shape = 's32[2]{0}', space=sflag, size = 0x8, scoped, tag = 'scoped memory for tpu_custom_call.1']
    #allocation5 [shape = 'u8[98304]{0}', space=vmem, size = 0x18000, scoped, tag = 'input window, operand 1, single buffered']
    #allocation6 [shape = 's32[1]{0}', space=sflag, size = 0x4, scoped, tag = 'scoped memory for tpu_custom_call.1']
    #allocation7 [shape = 'u8[1536]{0}', space=vmem, size = 0x800, scoped, tag = 'input window, operand 2, single buffered']
    #allocation8 [shape = 'u8[786432]{0}', space=vmem, size = 0xc0000, scoped, tag = 'output window, operand 0']
    %8 = vsyncpa [#allocation3], 0
    %s9 = scalar_lea.sflag [#allocation3], 1
    %10 = vsyncpa %s9, 0
    %11 = vsyncpa [#allocation6], 0
    %12 = vsyncpa [#allocation4], 0
    %s13 = scalar_lea.sflag [#allocation4], 1
    %14 = vsyncpa %s13, 0
    loop: start=0, step=1, limit=6
    $region2: #{tpu_custom_call.1} parent=1 // loop_pre_header
      _
    $region3: #{tpu_custom_call.1} parent=1 // loop_header
      %s16 = sphi 0, %s20
      %p17 = scmp.ge.s32.totalorder %s16, 6
      %s23 = sphi 0, %s35
      %s24 = sphi 0, %s31
      %s25 = sphi 0, %s23
      %s26 = sphi 0, %s24
      %s27 = sphi 0, %s25
      %s28 = sphi 0, %s26
      %s40 = sphi 0, %s42
      %s43 = sphi 0, %s40
      %s44 = sphi 0, %s43
      %s60 = sphi 0, %s44
      %s64 = sphi 0, %s64
      %s66 = sphi 0, %s64
      %s67 = sphi 0, %s66
      %s81 = sphi 0, %s67
      %s85 = sphi 0, %s85
      %s87 = sphi 0, %s85
      %s88 = sphi 0, %s87
      %s102 = sphi 0, %s88
      %s110 = sphi 0, %s112
      %s113 = sphi 0, %s110
      %s114 = sphi 0, %s113
      %s130 = sphi 0, %s114
    $region4: #{tpu_custom_call.1} parent=1 // loop_header_branch
      %19 = sbr.rel (%p17) target = $region8
    $region5: #{tpu_custom_call.1} parent=1 // loop_body
      %s21 = ssub.s32 %s16, 1
      %s22 = ssub.s32 %s16, 2
      %s29 = sadd.s32 1, %s24
      %p30 = scmp.ge.s32.totalorder %s29, 2
      %s31 = scalar_select %p30, 0, %s29
      %s32 = sadd.s32 1, %s23
      %s33 = scalar_select %p30, %s32, %s23
      %p34 = scmp.ge.s32.totalorder %s33, 2
      %s35 = scalar_select %p34, 0, %s33
      %s36 = ssub.s32 %s23, %s35
      %s37 = ssub.s32 %s24, %s31
      %s38 = sor.u32 %s36, %s37
      %p39 = scmp.eq.s32.totalorder %s38, 0
      %s41 = sadd.s32 %s40, 1
      %s42 = scalar_select %p39, %s40, %s41
      %p45 = pneg %p39
      %p46 = scmp.eq.s32.totalorder %s16, 3
      %p47 = por %p45, %p46
      %p48 = scmp.ne.s32.totalorder %s40, %s43
      %p49 = scmp.eq.s32.totalorder %s16, 0
      %p50 = por %p48, %p49
      %p51 = scmp.ne.s32.totalorder %s40, %s43
      %p52 = scmp.eq.s32.totalorder %s21, 3
      %p53 = por %p51, %p52
      %p54 = scmp.ne.s32.totalorder %s43, %s44
      %p55 = scmp.eq.s32.totalorder %s21, 0
      %p56 = por %p54, %p55
      %p57 = scmp.ne.s32.totalorder %s43, %s44
      %p58 = scmp.eq.s32.totalorder %s22, 3
      %p59 = por %p57, %p58
      %p61 = scmp.ne.s32.totalorder %s44, %s60
      %p62 = scmp.eq.s32.totalorder %s22, 0
      %p63 = por %p61, %p62
      %s65 = sadd.s32 %s64, 1
      %p68 = scmp.eq.s32.totalorder %s16, 3
      %p69 = scmp.ne.s32.totalorder %s64, %s66
      %p70 = scmp.eq.s32.totalorder %s16, 0
      %p71 = por %p69, %p70
      %p72 = scmp.ne.s32.totalorder %s64, %s66
      %p73 = scmp.eq.s32.totalorder %s21, 3
      %p74 = por %p72, %p73
      %p75 = scmp.ne.s32.totalorder %s66, %s67
      %p76 = scmp.eq.s32.totalorder %s21, 0
      %p77 = por %p75, %p76
      %p78 = scmp.ne.s32.totalorder %s66, %s67
      %p79 = scmp.eq.s32.totalorder %s22, 3
      %p80 = por %p78, %p79
      %p82 = scmp.ne.s32.totalorder %s67, %s81
      %p83 = scmp.eq.s32.totalorder %s22, 0
      %p84 = por %p82, %p83
      %s86 = sadd.s32 %s85, 1
      %p89 = scmp.eq.s32.totalorder %s16, 3
      %p90 = scmp.ne.s32.totalorder %s85, %s87
      %p91 = scmp.eq.s32.totalorder %s16, 0
      %p92 = por %p90, %p91
      %p93 = scmp.ne.s32.totalorder %s85, %s87
      %p94 = scmp.eq.s32.totalorder %s21, 3
      %p95 = por %p93, %p94
      %p96 = scmp.ne.s32.totalorder %s87, %s88
      %p97 = scmp.eq.s32.totalorder %s21, 0
      %p98 = por %p96, %p97
      %p99 = scmp.ne.s32.totalorder %s87, %s88
      %p100 = scmp.eq.s32.totalorder %s22, 3
      %p101 = por %p99, %p100
      %p103 = scmp.ne.s32.totalorder %s88, %s102
      %p104 = scmp.eq.s32.totalorder %s22, 0
      %p105 = por %p103, %p104
      %s106 = ssub.s32 %s23, %s35
      %s107 = ssub.s32 %s24, %s31
      %s108 = sor.u32 %s106, %s107
      %p109 = scmp.eq.s32.totalorder %s108, 0
      %s111 = sadd.s32 %s110, 1
      %s112 = scalar_select %p109, %s110, %s111
      %p115 = pneg %p109
      %p116 = scmp.eq.s32.totalorder %s16, 3
      %p117 = por %p115, %p116
      %p118 = scmp.ne.s32.totalorder %s110, %s113
      %p119 = scmp.eq.s32.totalorder %s16, 0
      %p120 = por %p118, %p119
      %p121 = scmp.ne.s32.totalorder %s110, %s113
      %p122 = scmp.eq.s32.totalorder %s21, 3
      %p123 = por %p121, %p122
      %p124 = scmp.ne.s32.totalorder %s113, %s114
      %p125 = scmp.eq.s32.totalorder %s21, 0
      %p126 = por %p124, %p125
      %p127 = scmp.ne.s32.totalorder %s113, %s114
      %p128 = scmp.eq.s32.totalorder %s22, 3
      %p129 = por %p127, %p128
      %p131 = scmp.ne.s32.totalorder %s114, %s130
      %p132 = scmp.eq.s32.totalorder %s22, 0
      %p133 = por %p131, %p132
      %p134 = scmp.le.s32.totalorder 1, %s16
      %p135 = scmp.lt.s32.totalorder %s16, 5
      %p136 = pnand %p134, %p135
      %p137 = pneg %p136
      // Predicated region
      $region9: #{tpu_custom_call.1} parent=5 // pred_check
        _
      $region10: #{tpu_custom_call.1} parent=5 // pred_check_branch
        %139 = sbr.rel (%p136) target = $region12
      $region11: #{tpu_custom_call.1} parent=5 // pred_region
        %s140 = ssub.s32 %s16, 1
        // Predicated region
        $region13: #{tpu_custom_call.1} parent=11 // pred_check
          %p141 = pneg %p77
        $region14: #{tpu_custom_call.1} parent=11 // pred_check_branch
          %143 = sbr.rel (%p141) target = $region16
        $region15: #{tpu_custom_call.1} parent=11 // pred_region
          %s145 = ssub.s32 3072, 3072
          %146 = vsyncadd [#allocation6], %s145
          %s147 = sshll.u32 [#allocation5], 4
          %s148 = int_to_ptr.vmem [resolvable:$true] %s147
          %153 = dma.hbm_to_vmem [thread:$0]  %s1, 3072, %s148, [#allocation6], 192, 192, 12
        $region16: #{tpu_custom_call.1} parent=11 // pred_fallthru
          _
        // Predicated region
        $region17: #{tpu_custom_call.1} parent=11 // pred_check
          %p154 = pneg %p98
        $region18: #{tpu_custom_call.1} parent=11 // pred_check_branch
          %156 = sbr.rel (%p154) target = $region20
        $region19: #{tpu_custom_call.1} parent=11 // pred_region
          %s158 = ssub.s32 48, 48
          %159 = vsyncadd [#allocation6], %s158
          %s161 = sshll.u32 [#allocation7], 4
          %s162 = int_to_ptr.vmem [resolvable:$true] %s161
          %164 = dma.hbm_to_vmem [thread:$0]  %s2, 48, %s162, [#allocation6]
        $region20: #{tpu_custom_call.1} parent=11 // pred_fallthru
          _
      $region12: #{tpu_custom_call.1} parent=5 // pred_fallthru
        _
      %p165 = scmp.lt.s32.totalorder %s16, 4
      // Predicated region
      $region21: #{tpu_custom_call.1} parent=5 // pred_check
        %p166 = pneg %p165
      $region22: #{tpu_custom_call.1} parent=5 // pred_check_branch
        %168 = sbr.rel (%p166) target = $region24
      $region23: #{tpu_custom_call.1} parent=5 // pred_region
        // Predicated region
        $region25: #{tpu_custom_call.1} parent=23 // pred_check
          %p169 = pneg %p50
        $region26: #{tpu_custom_call.1} parent=23 // pred_check_branch
          %171 = sbr.rel (%p169) target = $region28
        $region27: #{tpu_custom_call.1} parent=23 // pred_region
          %s172 = sand.u32 %s40, 1
          %s173 = scalar_lea.sflag [#allocation3], %s172
          %s174 = sand.u32 %s40, 1
          %s175 = smul.addr %s174, 512
          %s176 = scalar_lea.vmem [#allocation2], %s175
          %s177 = smul.u32 64, %s24
          %s179 = ssub.s32 8192, 8192
          %180 = vsyncadd %s173, %s179
          %s181 = smul.addr %s23, 128
          %s182 = sadd.s32 %s177, %s181
          %s183 = smul.addr %s182, 128
          %s184 = scalar_lea.hbm %s0, %s183
          %s185 = sshll.u32 %s176, 4
          %s186 = int_to_ptr.vmem [resolvable:$true] %s185
          %191 = dma.hbm_to_vmem [thread:$0]  %s184, 8192, %s186, %s173, 128, 128, 8
        $region28: #{tpu_custom_call.1} parent=23 // pred_fallthru
          _
      $region24: #{tpu_custom_call.1} parent=5 // pred_fallthru
        _
      %p192 = scmp.le.s32.totalorder 1, %s16
      %p193 = scmp.lt.s32.totalorder %s16, 5
      %p194 = pnand %p192, %p193
      %p195 = pneg %p194
      // Predicated region
      $region29: #{tpu_custom_call.1} parent=5 // pred_check
        _
      $region30: #{tpu_custom_call.1} parent=5 // pred_check_branch
        %197 = sbr.rel (%p194) target = $region32
      $region31: #{tpu_custom_call.1} parent=5 // pred_region
        %s198 = ssub.s32 %s16, 1
        %s199 = sand.u32 %s43, 1
        %s200 = scalar_lea.sflag [#allocation3], %s199
        %s201 = sand.u32 %s43, 1
        %s202 = smul.addr %s201, 512
        %s203 = scalar_lea.vmem [#allocation2], %s202
        // Predicated region
        $region33: #{tpu_custom_call.1} parent=31 // pred_check
          %p204 = pneg %p56
        $region34: #{tpu_custom_call.1} parent=31 // pred_check_branch
          %206 = sbr.rel (%p204) target = $region36
        $region35: #{tpu_custom_call.1} parent=31 // pred_region
          %207 = dma.done %s200, 8192
        $region36: #{tpu_custom_call.1} parent=31 // pred_fallthru
          _
        // Predicated region
        $region37: #{tpu_custom_call.1} parent=31 // pred_check
          %p208 = pneg %p77
        $region38: #{tpu_custom_call.1} parent=31 // pred_check_branch
          %210 = sbr.rel (%p208) target = $region40
        $region39: #{tpu_custom_call.1} parent=31 // pred_region
          %211 = dma.done [#allocation6], 3072
        $region40: #{tpu_custom_call.1} parent=31 // pred_fallthru
          _
        // Predicated region
        $region41: #{tpu_custom_call.1} parent=31 // pred_check
          %p212 = pneg %p98
        $region42: #{tpu_custom_call.1} parent=31 // pred_check_branch
          %214 = sbr.rel (%p212) target = $region44
        $region43: #{tpu_custom_call.1} parent=31 // pred_region
          %215 = dma.done [#allocation6], 48
        $region44: #{tpu_custom_call.1} parent=31 // pred_fallthru
          _
        %s216 = sand.u32 %s43, 1
        %s217 = scalar_lea.sflag [#allocation3], %s216
        %s218 = sand.u32 %s43, 1
        %s219 = smul.addr %s218, 512
        %s220 = scalar_lea.vmem [#allocation2], %s219
        %p221 = pneg %p56
        %p222 = pneg %p53
        %p223 = pneg %p77
        %p224 = pneg %p74
        %p225 = pneg %p98
        %p226 = pneg %p95
        %p227 = pneg %p126
        %p228 = pneg %p123
        %s229 = sand.u32 %s113, 1
        %s230 = scalar_lea.sflag [#allocation4], %s229
        %s231 = sand.u32 %s113, 1
        %s232 = smul.addr %s231, 768
        %s233 = scalar_lea.vmem [#allocation8], %s232
        %s234 = smul.u32 64, %s26
        %s235 = smul.u32 64, %s26
        %v237 = vld [vmem:[%s203] sm:$0xff]
        %v238 = vld [vmem:[%s203 + $0x8] sm:$0xff]
        %v239 = vld [vmem:[%s203 + $0x10] sm:$0xff]
        %v240 = vld [vmem:[%s203 + $0x18] sm:$0xff]
        %v241 = vld [vmem:[%s203 + $0x20] sm:$0xff]
        %v242 = vld [vmem:[%s203 + $0x28] sm:$0xff]
        %v243 = vld [vmem:[%s203 + $0x30] sm:$0xff]
        %v244 = vld [vmem:[%s203 + $0x38] sm:$0xff]
        %v245 = vld [vmem:[%s203 + $0x40] sm:$0xff]
        %v246 = vld [vmem:[%s203 + $0x48] sm:$0xff]
        %v247 = vld [vmem:[%s203 + $0x50] sm:$0xff]
        %v248 = vld [vmem:[%s203 + $0x58] sm:$0xff]
        %v249 = vld [vmem:[%s203 + $0x60] sm:$0xff]
        %v250 = vld [vmem:[%s203 + $0x68] sm:$0xff]
        %v251 = vld [vmem:[%s203 + $0x70] sm:$0xff]
        %v252 = vld [vmem:[%s203 + $0x78] sm:$0xff]
        %v253 = vld [vmem:[%s203 + $0x80] sm:$0xff]
        %v254 = vld [vmem:[%s203 + $0x88] sm:$0xff]
        %v255 = vld [vmem:[%s203 + $0x90] sm:$0xff]
        %v256 = vld [vmem:[%s203 + $0x98] sm:$0xff]
        %v257 = vld [vmem:[%s203 + $0xa0] sm:$0xff]
        %v258 = vld [vmem:[%s203 + $0xa8] sm:$0xff]
        %v259 = vld [vmem:[%s203 + $0xb0] sm:$0xff]
        %v260 = vld [vmem:[%s203 + $0xb8] sm:$0xff]
        %v261 = vld [vmem:[%s203 + $0xc0] sm:$0xff]
        %v262 = vld [vmem:[%s203 + $0xc8] sm:$0xff]
        %v263 = vld [vmem:[%s203 + $0xd0] sm:$0xff]
        %v264 = vld [vmem:[%s203 + $0xd8] sm:$0xff]
        %v265 = vld [vmem:[%s203 + $0xe0] sm:$0xff]
        %v266 = vld [vmem:[%s203 + $0xe8] sm:$0xff]
        %v267 = vld [vmem:[%s203 + $0xf0] sm:$0xff]
        %v268 = vld [vmem:[%s203 + $0xf8] sm:$0xff]
        %v269 = vld [vmem:[%s203 + $0x100] sm:$0xff]
        %v270 = vld [vmem:[%s203 + $0x108] sm:$0xff]
        %v271 = vld [vmem:[%s203 + $0x110] sm:$0xff]
        %v272 = vld [vmem:[%s203 + $0x118] sm:$0xff]
        %v273 = vld [vmem:[%s203 + $0x120] sm:$0xff]
        %v274 = vld [vmem:[%s203 + $0x128] sm:$0xff]
        %v275 = vld [vmem:[%s203 + $0x130] sm:$0xff]
        %v276 = vld [vmem:[%s203 + $0x138] sm:$0xff]
        %v277 = vld [vmem:[%s203 + $0x140] sm:$0xff]
        %v278 = vld [vmem:[%s203 + $0x148] sm:$0xff]
        %v279 = vld [vmem:[%s203 + $0x150] sm:$0xff]
        %v280 = vld [vmem:[%s203 + $0x158] sm:$0xff]
        %v281 = vld [vmem:[%s203 + $0x160] sm:$0xff]
        %v282 = vld [vmem:[%s203 + $0x168] sm:$0xff]
        %v283 = vld [vmem:[%s203 + $0x170] sm:$0xff]
        %v284 = vld [vmem:[%s203 + $0x178] sm:$0xff]
        %v285 = vld [vmem:[%s203 + $0x180] sm:$0xff]
        %v286 = vld [vmem:[%s203 + $0x188] sm:$0xff]
        %v287 = vld [vmem:[%s203 + $0x190] sm:$0xff]
        %v288 = vld [vmem:[%s203 + $0x198] sm:$0xff]
        %v289 = vld [vmem:[%s203 + $0x1a0] sm:$0xff]
        %v290 = vld [vmem:[%s203 + $0x1a8] sm:$0xff]
        %v291 = vld [vmem:[%s203 + $0x1b0] sm:$0xff]
        %v292 = vld [vmem:[%s203 + $0x1b8] sm:$0xff]
        %v293 = vld [vmem:[%s203 + $0x1c0] sm:$0xff]
        %v294 = vld [vmem:[%s203 + $0x1c8] sm:$0xff]
        %v295 = vld [vmem:[%s203 + $0x1d0] sm:$0xff]
        %v296 = vld [vmem:[%s203 + $0x1d8] sm:$0xff]
        %v297 = vld [vmem:[%s203 + $0x1e0] sm:$0xff]
        %v298 = vld [vmem:[%s203 + $0x1e8] sm:$0xff]
        %v299 = vld [vmem:[%s203 + $0x1f0] sm:$0xff]
        %v300 = vld [vmem:[%s203 + $0x1f8] sm:$0xff]
        %v301 = vpack.c.bf16 %v238, %v237
        %v302 = vpack.c.bf16 %v240, %v239
        %v303 = vpack.c.bf16 %v242, %v241
        %v304 = vpack.c.bf16 %v244, %v243
        %v305 = vpack.c.bf16 %v246, %v245
        %v306 = vpack.c.bf16 %v248, %v247
        %v307 = vpack.c.bf16 %v250, %v249
        %v308 = vpack.c.bf16 %v252, %v251
        %v309 = vpack.c.bf16 %v254, %v253
        %v310 = vpack.c.bf16 %v256, %v255
        %v311 = vpack.c.bf16 %v258, %v257
        %v312 = vpack.c.bf16 %v260, %v259
        %v313 = vpack.c.bf16 %v262, %v261
        %v314 = vpack.c.bf16 %v264, %v263
        %v315 = vpack.c.bf16 %v266, %v265
        %v316 = vpack.c.bf16 %v268, %v267
        %v317 = vpack.c.bf16 %v270, %v269
        %v318 = vpack.c.bf16 %v272, %v271
        %v319 = vpack.c.bf16 %v274, %v273
        %v320 = vpack.c.bf16 %v276, %v275
        %v321 = vpack.c.bf16 %v278, %v277
        %v322 = vpack.c.bf16 %v280, %v279
        %v323 = vpack.c.bf16 %v282, %v281
        %v324 = vpack.c.bf16 %v284, %v283
        %v325 = vpack.c.bf16 %v286, %v285
        %v326 = vpack.c.bf16 %v288, %v287
        %v327 = vpack.c.bf16 %v290, %v289
        %v328 = vpack.c.bf16 %v292, %v291
        %v329 = vpack.c.bf16 %v294, %v293
        %v330 = vpack.c.bf16 %v296, %v295
        %v331 = vpack.c.bf16 %v298, %v297
        %v332 = vpack.c.bf16 %v300, %v299
        %v333 = vld [vmem:[#allocation5] sm:$0xff]
        %v334 = vld [vmem:[#allocation5 + $0x8] sm:$0xf]
        %v335 = vld [vmem:[#allocation5 + $0xc] sm:$0xff]
        %v336 = vld [vmem:[#allocation5 + $0x14] sm:$0xf]
        %v337 = vld [vmem:[#allocation5 + $0x18] sm:$0xff]
        %v338 = vld [vmem:[#allocation5 + $0x20] sm:$0xf]
        %v339 = vld [vmem:[#allocation5 + $0x24] sm:$0xff]
        %v340 = vld [vmem:[#allocation5 + $0x2c] sm:$0xf]
        %v341 = vld [vmem:[#allocation5 + $0x30] sm:$0xff]
        %v342 = vld [vmem:[#allocation5 + $0x38] sm:$0xf]
        %v343 = vld [vmem:[#allocation5 + $0x3c] sm:$0xff]
        %v344 = vld [vmem:[#allocation5 + $0x44] sm:$0xf]
        %v345 = vld [vmem:[#allocation5 + $0x48] sm:$0xff]
        %v346 = vld [vmem:[#allocation5 + $0x50] sm:$0xf]
        %v347 = vld [vmem:[#allocation5 + $0x54] sm:$0xff]
        %v348 = vld [vmem:[#allocation5 + $0x5c] sm:$0xf]
        %v349 = vld [vmem:[#allocation5 + $0x60] sm:$0xff]
        %v350 = vld [vmem:[#allocation5 + $0x68] sm:$0xf]
        %v351 = vld [vmem:[#allocation5 + $0x6c] sm:$0xff]
        %v352 = vld [vmem:[#allocation5 + $0x74] sm:$0xf]
        %v353 = vld [vmem:[#allocation5 + $0x78] sm:$0xff]
        %v354 = vld [vmem:[#allocation5 + $0x80] sm:$0xf]
        %v355 = vld [vmem:[#allocation5 + $0x84] sm:$0xff]
        %v356 = vld [vmem:[#allocation5 + $0x8c] sm:$0xf]
        %v357 = vld [vmem:[#allocation5 + $0x90] sm:$0xff]
        %v358 = vld [vmem:[#allocation5 + $0x98] sm:$0xf]
        %v359 = vld [vmem:[#allocation5 + $0x9c] sm:$0xff]
        %v360 = vld [vmem:[#allocation5 + $0xa4] sm:$0xf]
        %v361 = vld [vmem:[#allocation5 + $0xa8] sm:$0xff]
        %v362 = vld [vmem:[#allocation5 + $0xb0] sm:$0xf]
        %v363 = vld [vmem:[#allocation5 + $0xb4] sm:$0xff]
        %v364 = vld [vmem:[#allocation5 + $0xbc] sm:$0xf]
        %v365 = vld [vmem:[#allocation7] sm:$0x7]
        %v367 = vlaneseq
        %v368 = vshrl.u32 %v367, 7
        %v369 = vsub.s32 0, %v368
        %v370 = vrot.slane %v365, %v369
        %v371 = vlaneseq
        %v372 = vshrl.u32 %v371, 7
        %v373 = vsub.s32 1, %v372
        %v374 = vrot.slane %v365, %v373
        %v375 = vlaneseq
        %v376 = vshrl.u32 %v375, 7
        %v377 = vsub.s32 2, %v376
        %v378 = vrot.slane %v365, %v377
        %v414 = vunpack.c.l.b16 %v333
        %v415 = vunpack.c.h.b16 %v333
        %v416 = vunpack.c.l.b16 %v334
        %v417 = vunpack.c.l.b16 %v335
        %v418 = vunpack.c.h.b16 %v335
        %v419 = vunpack.c.l.b16 %v336
        %v420 = vunpack.c.l.b16 %v337
        %v421 = vunpack.c.h.b16 %v337
        %v422 = vunpack.c.l.b16 %v338
        %v423 = vunpack.c.l.b16 %v339
        %v424 = vunpack.c.h.b16 %v339
        %v425 = vunpack.c.l.b16 %v340
        %v426 = vunpack.c.l.b16 %v341
        %v427 = vunpack.c.h.b16 %v341
        %v428 = vunpack.c.l.b16 %v342
        %v429 = vunpack.c.l.b16 %v343
        %v430 = vunpack.c.h.b16 %v343
        %v431 = vunpack.c.l.b16 %v344
        %v432 = vunpack.c.l.b16 %v345
        %v433 = vunpack.c.h.b16 %v345
        %v434 = vunpack.c.l.b16 %v346
        %v435 = vunpack.c.l.b16 %v347
        %v436 = vunpack.c.h.b16 %v347
        %v437 = vunpack.c.l.b16 %v348
        %v438 = vunpack.c.l.b16 %v349
        %v439 = vunpack.c.h.b16 %v349
        %v440 = vunpack.c.l.b16 %v350
        %v441 = vunpack.c.l.b16 %v351
        %v442 = vunpack.c.h.b16 %v351
        %v443 = vunpack.c.l.b16 %v352
        %v444 = vunpack.c.l.b16 %v353
        %v445 = vunpack.c.h.b16 %v353
        %v446 = vunpack.c.l.b16 %v354
        %v447 = vunpack.c.l.b16 %v355
        %v448 = vunpack.c.h.b16 %v355
        %v449 = vunpack.c.l.b16 %v356
        %v450 = vunpack.c.l.b16 %v357
        %v451 = vunpack.c.h.b16 %v357
        %v452 = vunpack.c.l.b16 %v358
        %v453 = vunpack.c.l.b16 %v359
        %v454 = vunpack.c.h.b16 %v359
        %v455 = vunpack.c.l.b16 %v360
        %v456 = vunpack.c.l.b16 %v361
        %v457 = vunpack.c.h.b16 %v361
        %v458 = vunpack.c.l.b16 %v362
        %v459 = vunpack.c.l.b16 %v363
        %v460 = vunpack.c.h.b16 %v363
        %v461 = vunpack.c.l.b16 %v364
        %v462 = vpack.c.b16 %v417, %v414
        %v463 = vpack.c.b16 %v418, %v415
        %v464 = vpack.c.b16 %v419, %v416
        %v465 = vpack.c.b16 %v423, %v420
        %v466 = vpack.c.b16 %v424, %v421
        %v467 = vpack.c.b16 %v425, %v422
        %v468 = vpack.c.b16 %v429, %v426
        %v469 = vpack.c.b16 %v430, %v427
        %v470 = vpack.c.b16 %v431, %v428
        %v471 = vpack.c.b16 %v435, %v432
        %v472 = vpack.c.b16 %v436, %v433
        %v473 = vpack.c.b16 %v437, %v434
        %v474 = vpack.c.b16 %v441, %v438
        %v475 = vpack.c.b16 %v442, %v439
        %v476 = vpack.c.b16 %v443, %v440
        %v477 = vpack.c.b16 %v447, %v444
        %v478 = vpack.c.b16 %v448, %v445
        %v479 = vpack.c.b16 %v449, %v446
        %v480 = vpack.c.b16 %v453, %v450
        %v481 = vpack.c.b16 %v454, %v451
        %v482 = vpack.c.b16 %v455, %v452
        %v483 = vpack.c.b16 %v459, %v456
        %v484 = vpack.c.b16 %v460, %v457
        %v485 = vpack.c.b16 %v461, %v458
        %510 = vmatprep.subr.bf16.mxu0 %v463
        %511 = vmatpush1.bf16.msra.mxu0 %v462
        %512 = vmatprep.subr.bf16.mxu0 %v466
        %513 = vmatpush1.bf16.msra.mxu0 %v465
        %514 = vmatprep.subr.bf16.mxu0 %v469
        %515 = vmatpush1.bf16.msra.mxu0 %v468
        %516 = vmatprep.subr.bf16.mxu0 %v472
        %517 = vmatpush1.bf16.msra.mxu0 %v471
        %518 = vmatprep.subr.bf16.mxu0 %v475
        %519 = vmatpush1.bf16.msra.mxu0 %v474
        %520 = vmatprep.subr.bf16.mxu0 %v478
        %521 = vmatpush1.bf16.msra.mxu0 %v477
        %522 = vmatprep.subr.bf16.mxu0 %v481
        %523 = vmatpush1.bf16.msra.mxu0 %v480
        %524 = vmatprep.subr.bf16.mxu0 %v484
        %525 = vmatpush1.bf16.msra.mxu0 %v483
        %526 = vmatprep.subr.bf16.mxu0 0
        %527 = vmatpush1.bf16.msra.mxu0 0
        %528 = vmatprep.subr.bf16.mxu0 0
        %529 = vmatpush1.bf16.msra.mxu0 0
        %530 = vmatprep.subr.bf16.mxu0 0
        %531 = vmatpush1.bf16.msra.mxu0 0
        %532 = vmatprep.subr.bf16.mxu0 0
        %533 = vmatpush1.bf16.msra.mxu0 0
        %534 = vmatprep.subr.bf16.mxu0 0
        %535 = vmatpush1.bf16.msra.mxu0 0
        %536 = vmatprep.subr.bf16.mxu0 0
        %537 = vmatpush1.bf16.msra.mxu0 0
        %538 = vmatprep.subr.bf16.mxu0 0
        %539 = vmatpush1.bf16.msra.mxu0 0
        %540 = vmatprep.subr.bf16.mxu0 0
        %541 = vmatpush1.bf16.msra.mxu0 0
        %542 = vmatprep.mubr.bf16.mxu0 0
        %543 = vmatmul.mubr.bf16.gmra.mrb[0].mxu0 %v301
        %v544 = vpop.f32.mrb[0].mxu0
        %v545 = vadd.f32 %v370, %v544
        %v546 = vpop.f32.mrb[0].mxu0
        %v547 = vadd.f32 %v374, %v546
        %v548 = vpop.f32.mrb[0].mxu0
        %v549 = vadd.f32 %v370, %v548
        %v550 = vpop.f32.mrb[0].mxu0
        %v551 = vadd.f32 %v374, %v550
        %552 = vmatprep.mubr.bf16.mxu0 0
        %553 = vmatmul.mubr.bf16.gmra.mrb[0].mxu0 %v302
        %v554 = vpop.f32.mrb[0].mxu0
        %v555 = vadd.f32 %v370, %v554
        %v556 = vpop.f32.mrb[0].mxu0
        %v557 = vadd.f32 %v374, %v556
        %v558 = vpop.f32.mrb[0].mxu0
        %v559 = vadd.f32 %v370, %v558
        %v560 = vpop.f32.mrb[0].mxu0
        %v561 = vadd.f32 %v374, %v560
        %562 = vmatprep.mubr.bf16.mxu0 0
        %563 = vmatmul.mubr.bf16.gmra.mrb[0].mxu0 %v303
        %v564 = vpop.f32.mrb[0].mxu0
        %v565 = vadd.f32 %v370, %v564
        %v566 = vpop.f32.mrb[0].mxu0
        %v567 = vadd.f32 %v374, %v566
        %v568 = vpop.f32.mrb[0].mxu0
        %v569 = vadd.f32 %v370, %v568
        %v570 = vpop.f32.mrb[0].mxu0
        %v571 = vadd.f32 %v374, %v570
        %572 = vmatprep.mubr.bf16.mxu0 0
        %573 = vmatmul.mubr.bf16.gmra.mrb[0].mxu0 %v304
        %v574 = vpop.f32.mrb[0].mxu0
        %v575 = vadd.f32 %v370, %v574
        %v576 = vpop.f32.mrb[0].mxu0
        %v577 = vadd.f32 %v374, %v576
        %v578 = vpop.f32.mrb[0].mxu0
        %v579 = vadd.f32 %v370, %v578
        %v580 = vpop.f32.mrb[0].mxu0
        %v581 = vadd.f32 %v374, %v580
        %582 = vmatprep.mubr.bf16.mxu0 0
        %583 = vmatmul.mubr.bf16.gmra.mrb[0].mxu0 %v305
        %v584 = vpop.f32.mrb[0].mxu0
        %v585 = vadd.f32 %v370, %v584
        %v586 = vpop.f32.mrb[0].mxu0
        %v587 = vadd.f32 %v374, %v586
        %v588 = vpop.f32.mrb[0].mxu0
        %v589 = vadd.f32 %v370, %v588
        %v590 = vpop.f32.mrb[0].mxu0
        %v591 = vadd.f32 %v374, %v590
        %592 = vmatprep.mubr.bf16.mxu0 0
        %593 = vmatmul.mubr.bf16.gmra.mrb[0].mxu0 %v306
        %v594 = vpop.f32.mrb[0].mxu0
        %v595 = vadd.f32 %v370, %v594
        %v596 = vpop.f32.mrb[0].mxu0
        %v597 = vadd.f32 %v374, %v596
        %v598 = vpop.f32.mrb[0].mxu0
        %v599 = vadd.f32 %v370, %v598
        %v600 = vpop.f32.mrb[0].mxu0
        %v601 = vadd.f32 %v374, %v600
        %602 = vmatprep.mubr.bf16.mxu0 0
        %603 = vmatmul.mubr.bf16.gmra.mrb[0].mxu0 %v307
        %v604 = vpop.f32.mrb[0].mxu0
        %v605 = vadd.f32 %v370, %v604
        %v606 = vpop.f32.mrb[0].mxu0
        %v607 = vadd.f32 %v374, %v606
        %v608 = vpop.f32.mrb[0].mxu0
        %v609 = vadd.f32 %v370, %v608
        %v610 = vpop.f32.mrb[0].mxu0
        %v611 = vadd.f32 %v374, %v610
        %612 = vmatprep.mubr.bf16.mxu0 0
        %613 = vmatmul.mubr.bf16.gmra.mrb[0].mxu0 %v308
        %v614 = vpop.f32.mrb[0].mxu0
        %v615 = vadd.f32 %v370, %v614
        %v616 = vpop.f32.mrb[0].mxu0
        %v617 = vadd.f32 %v374, %v616
        %v618 = vpop.f32.mrb[0].mxu0
        %v619 = vadd.f32 %v370, %v618
        %v620 = vpop.f32.mrb[0].mxu0
        %v621 = vadd.f32 %v374, %v620
        %622 = vmatprep.mubr.bf16.mxu0 0
        %623 = vmatmul.mubr.bf16.gmra.mrb[0].mxu0 %v309
        %v624 = vpop.f32.mrb[0].mxu0
        %v625 = vadd.f32 %v370, %v624
        %v626 = vpop.f32.mrb[0].mxu0
        %v627 = vadd.f32 %v374, %v626
        %v628 = vpop.f32.mrb[0].mxu0
        %v629 = vadd.f32 %v370, %v628
        %v630 = vpop.f32.mrb[0].mxu0
        %v631 = vadd.f32 %v374, %v630
        %632 = vmatprep.mubr.bf16.mxu0 0
        %633 = vmatmul.mubr.bf16.gmra.mrb[0].mxu0 %v310
        %v634 = vpop.f32.mrb[0].mxu0
        %v635 = vadd.f32 %v370, %v634
        %v636 = vpop.f32.mrb[0].mxu0
        %v637 = vadd.f32 %v374, %v636
        %v638 = vpop.f32.mrb[0].mxu0
        %v639 = vadd.f32 %v370, %v638
        %v640 = vpop.f32.mrb[0].mxu0
        %v641 = vadd.f32 %v374, %v640
        %642 = vmatprep.mubr.bf16.mxu0 0
        %643 = vmatmul.mubr.bf16.gmra.mrb[0].mxu0 %v311
        %v644 = vpop.f32.mrb[0].mxu0
        %v645 = vadd.f32 %v370, %v644
        %v646 = vpop.f32.mrb[0].mxu0
        %v647 = vadd.f32 %v374, %v646
        %v648 = vpop.f32.mrb[0].mxu0
        %v649 = vadd.f32 %v370, %v648
        %v650 = vpop.f32.mrb[0].mxu0
        %v651 = vadd.f32 %v374, %v650
        %652 = vmatprep.mubr.bf16.mxu0 0
        %653 = vmatmul.mubr.bf16.gmra.mrb[0].mxu0 %v312
        %v654 = vpop.f32.mrb[0].mxu0
        %v655 = vadd.f32 %v370, %v654
        %v656 = vpop.f32.mrb[0].mxu0
        %v657 = vadd.f32 %v374, %v656
        %v658 = vpop.f32.mrb[0].mxu0
        %v659 = vadd.f32 %v370, %v658
        %v660 = vpop.f32.mrb[0].mxu0
        %v661 = vadd.f32 %v374, %v660
        %662 = vmatprep.mubr.bf16.mxu0 0
        %663 = vmatmul.mubr.bf16.gmra.mrb[0].mxu0 %v313
        %v664 = vpop.f32.mrb[0].mxu0
        %v665 = vadd.f32 %v370, %v664
        %v666 = vpop.f32.mrb[0].mxu0
        %v667 = vadd.f32 %v374, %v666
        %v668 = vpop.f32.mrb[0].mxu0
        %v669 = vadd.f32 %v370, %v668
        %v670 = vpop.f32.mrb[0].mxu0
        %v671 = vadd.f32 %v374, %v670
        %672 = vmatprep.mubr.bf16.mxu0 0
        %673 = vmatmul.mubr.bf16.gmra.mrb[0].mxu0 %v314
        %v674 = vpop.f32.mrb[0].mxu0
        %v675 = vadd.f32 %v370, %v674
        %v676 = vpop.f32.mrb[0].mxu0
        %v677 = vadd.f32 %v374, %v676
        %v678 = vpop.f32.mrb[0].mxu0
        %v679 = vadd.f32 %v370, %v678
        %v680 = vpop.f32.mrb[0].mxu0
        %v681 = vadd.f32 %v374, %v680
        %682 = vmatprep.mubr.bf16.mxu0 0
        %683 = vmatmul.mubr.bf16.gmra.mrb[0].mxu0 %v315
        %v684 = vpop.f32.mrb[0].mxu0
        %v685 = vadd.f32 %v370, %v684
        %v686 = vpop.f32.mrb[0].mxu0
        %v687 = vadd.f32 %v374, %v686
        %v688 = vpop.f32.mrb[0].mxu0
        %v689 = vadd.f32 %v370, %v688
        %v690 = vpop.f32.mrb[0].mxu0
        %v691 = vadd.f32 %v374, %v690
        %692 = vmatprep.mubr.bf16.mxu0 0
        %693 = vmatmul.mubr.bf16.gmra.mrb[0].mxu0 %v316
        %v694 = vpop.f32.mrb[0].mxu0
        %v695 = vadd.f32 %v370, %v694
        %v696 = vpop.f32.mrb[0].mxu0
        %v697 = vadd.f32 %v374, %v696
        %v698 = vpop.f32.mrb[0].mxu0
        %v699 = vadd.f32 %v370, %v698
        %v700 = vpop.f32.mrb[0].mxu0
        %v701 = vadd.f32 %v374, %v700
        %702 = vmatprep.mubr.bf16.mxu0 0
        %703 = vmatmul.mubr.bf16.gmra.mrb[0].mxu0 %v317
        %v704 = vpop.f32.mrb[0].mxu0
        %v705 = vadd.f32 %v370, %v704
        %v706 = vpop.f32.mrb[0].mxu0
        %v707 = vadd.f32 %v374, %v706
        %v708 = vpop.f32.mrb[0].mxu0
        %v709 = vadd.f32 %v370, %v708
        %v710 = vpop.f32.mrb[0].mxu0
        %v711 = vadd.f32 %v374, %v710
        %712 = vmatprep.mubr.bf16.mxu0 0
        %713 = vmatmul.mubr.bf16.gmra.mrb[0].mxu0 %v318
        %v714 = vpop.f32.mrb[0].mxu0
        %v715 = vadd.f32 %v370, %v714
        %v716 = vpop.f32.mrb[0].mxu0
        %v717 = vadd.f32 %v374, %v716
        %v718 = vpop.f32.mrb[0].mxu0
        %v719 = vadd.f32 %v370, %v718
        %v720 = vpop.f32.mrb[0].mxu0
        %v721 = vadd.f32 %v374, %v720
        %722 = vmatprep.mubr.bf16.mxu0 0
        %723 = vmatmul.mubr.bf16.gmra.mrb[0].mxu0 %v319
        %v724 = vpop.f32.mrb[0].mxu0
        %v725 = vadd.f32 %v370, %v724
        %v726 = vpop.f32.mrb[0].mxu0
        %v727 = vadd.f32 %v374, %v726
        %v728 = vpop.f32.mrb[0].mxu0
        %v729 = vadd.f32 %v370, %v728
        %v730 = vpop.f32.mrb[0].mxu0
        %v731 = vadd.f32 %v374, %v730
        %732 = vmatprep.mubr.bf16.mxu0 0
        %733 = vmatmul.mubr.bf16.gmra.mrb[0].mxu0 %v320
        %v734 = vpop.f32.mrb[0].mxu0
        %v735 = vadd.f32 %v370, %v734
        %v736 = vpop.f32.mrb[0].mxu0
        %v737 = vadd.f32 %v374, %v736
        %v738 = vpop.f32.mrb[0].mxu0
        %v739 = vadd.f32 %v370, %v738
        %v740 = vpop.f32.mrb[0].mxu0
        %v741 = vadd.f32 %v374, %v740
        %742 = vmatprep.mubr.bf16.mxu0 0
        %743 = vmatmul.mubr.bf16.gmra.mrb[0].mxu0 %v321
        %v744 = vpop.f32.mrb[0].mxu0
        %v745 = vadd.f32 %v370, %v744
        %v746 = vpop.f32.mrb[0].mxu0
        %v747 = vadd.f32 %v374, %v746
        %v748 = vpop.f32.mrb[0].mxu0
        %v749 = vadd.f32 %v370, %v748
        %v750 = vpop.f32.mrb[0].mxu0
        %v751 = vadd.f32 %v374, %v750
        %752 = vmatprep.mubr.bf16.mxu0 0
        %753 = vmatmul.mubr.bf16.gmra.mrb[0].mxu0 %v322
        %v754 = vpop.f32.mrb[0].mxu0
        %v755 = vadd.f32 %v370, %v754
        %v756 = vpop.f32.mrb[0].mxu0
        %v757 = vadd.f32 %v374, %v756
        %v758 = vpop.f32.mrb[0].mxu0
        %v759 = vadd.f32 %v370, %v758
        %v760 = vpop.f32.mrb[0].mxu0
        %v761 = vadd.f32 %v374, %v760
        %762 = vmatprep.mubr.bf16.mxu0 0
        %763 = vmatmul.mubr.bf16.gmra.mrb[0].mxu0 %v323
        %v764 = vpop.f32.mrb[0].mxu0
        %v765 = vadd.f32 %v370, %v764
        %v766 = vpop.f32.mrb[0].mxu0
        %v767 = vadd.f32 %v374, %v766
        %v768 = vpop.f32.mrb[0].mxu0
        %v769 = vadd.f32 %v370, %v768
        %v770 = vpop.f32.mrb[0].mxu0
        %v771 = vadd.f32 %v374, %v770
        %772 = vmatprep.mubr.bf16.mxu0 0
        %773 = vmatmul.mubr.bf16.gmra.mrb[0].mxu0 %v324
        %v774 = vpop.f32.mrb[0].mxu0
        %v775 = vadd.f32 %v370, %v774
        %v776 = vpop.f32.mrb[0].mxu0
        %v777 = vadd.f32 %v374, %v776
        %v778 = vpop.f32.mrb[0].mxu0
        %v779 = vadd.f32 %v370, %v778
        %v780 = vpop.f32.mrb[0].mxu0
        %v781 = vadd.f32 %v374, %v780
        %782 = vmatprep.mubr.bf16.mxu0 0
        %783 = vmatmul.mubr.bf16.gmra.mrb[0].mxu0 %v325
        %v784 = vpop.f32.mrb[0].mxu0
        %v785 = vadd.f32 %v370, %v784
        %v786 = vpop.f32.mrb[0].mxu0
        %v787 = vadd.f32 %v374, %v786
        %v788 = vpop.f32.mrb[0].mxu0
        %v789 = vadd.f32 %v370, %v788
        %v790 = vpop.f32.mrb[0].mxu0
        %v791 = vadd.f32 %v374, %v790
        %792 = vmatprep.mubr.bf16.mxu0 0
        %793 = vmatmul.mubr.bf16.gmra.mrb[0].mxu0 %v326
        %v794 = vpop.f32.mrb[0].mxu0
        %v795 = vadd.f32 %v370, %v794
        %v796 = vpop.f32.mrb[0].mxu0
        %v797 = vadd.f32 %v374, %v796
        %v798 = vpop.f32.mrb[0].mxu0
        %v799 = vadd.f32 %v370, %v798
        %v800 = vpop.f32.mrb[0].mxu0
        %v801 = vadd.f32 %v374, %v800
        %802 = vmatprep.mubr.bf16.mxu0 0
        %803 = vmatmul.mubr.bf16.gmra.mrb[0].mxu0 %v327
        %v804 = vpop.f32.mrb[0].mxu0
        %v805 = vadd.f32 %v370, %v804
        %v806 = vpop.f32.mrb[0].mxu0
        %v807 = vadd.f32 %v374, %v806
        %v808 = vpop.f32.mrb[0].mxu0
        %v809 = vadd.f32 %v370, %v808
        %v810 = vpop.f32.mrb[0].mxu0
        %v811 = vadd.f32 %v374, %v810
        %812 = vmatprep.mubr.bf16.mxu0 0
        %813 = vmatmul.mubr.bf16.gmra.mrb[0].mxu0 %v328
        %v814 = vpop.f32.mrb[0].mxu0
        %v815 = vadd.f32 %v370, %v814
        %v816 = vpop.f32.mrb[0].mxu0
        %v817 = vadd.f32 %v374, %v816
        %v818 = vpop.f32.mrb[0].mxu0
        %v819 = vadd.f32 %v370, %v818
        %v820 = vpop.f32.mrb[0].mxu0
        %v821 = vadd.f32 %v374, %v820
        %822 = vmatprep.mubr.bf16.mxu0 0
        %823 = vmatmul.mubr.bf16.gmra.mrb[0].mxu0 %v329
        %v824 = vpop.f32.mrb[0].mxu0
        %v825 = vadd.f32 %v370, %v824
        %v826 = vpop.f32.mrb[0].mxu0
        %v827 = vadd.f32 %v374, %v826
        %v828 = vpop.f32.mrb[0].mxu0
        %v829 = vadd.f32 %v370, %v828
        %v830 = vpop.f32.mrb[0].mxu0
        %v831 = vadd.f32 %v374, %v830
        %832 = vmatprep.mubr.bf16.mxu0 0
        %833 = vmatmul.mubr.bf16.gmra.mrb[0].mxu0 %v330
        %v834 = vpop.f32.mrb[0].mxu0
        %v835 = vadd.f32 %v370, %v834
        %v836 = vpop.f32.mrb[0].mxu0
        %v837 = vadd.f32 %v374, %v836
        %v838 = vpop.f32.mrb[0].mxu0
        %v839 = vadd.f32 %v370, %v838
        %v840 = vpop.f32.mrb[0].mxu0
        %v841 = vadd.f32 %v374, %v840
        %842 = vmatprep.mubr.bf16.mxu0 0
        %843 = vmatmul.mubr.bf16.gmra.mrb[0].mxu0 %v331
        %v844 = vpop.f32.mrb[0].mxu0
        %v845 = vadd.f32 %v370, %v844
        %v846 = vpop.f32.mrb[0].mxu0
        %v847 = vadd.f32 %v374, %v846
        %v848 = vpop.f32.mrb[0].mxu0
        %v849 = vadd.f32 %v370, %v848
        %v850 = vpop.f32.mrb[0].mxu0
        %v851 = vadd.f32 %v374, %v850
        %852 = vmatprep.mubr.bf16.mxu0 0
        %853 = vmatmul.mubr.bf16.gmra.mrb[0].mxu0 %v332
        %v854 = vpop.f32.mrb[0].mxu0
        %v855 = vadd.f32 %v370, %v854
        %v856 = vpop.f32.mrb[0].mxu0
        %v857 = vadd.f32 %v374, %v856
        %v858 = vpop.f32.mrb[0].mxu0
        %v859 = vadd.f32 %v370, %v858
        %v860 = vpop.f32.mrb[0].mxu0
        %v861 = vadd.f32 %v374, %v860
        %862 = vdwg.mxu0
        %863 = vmatprep.subr.bf16.mxu0 0
        %864 = vmatpush1.bf16.msra.mxu0 %v464
        %865 = vmatprep.subr.bf16.mxu0 0
        %866 = vmatpush1.bf16.msra.mxu0 %v467
        %867 = vmatprep.subr.bf16.mxu0 0
        %868 = vmatpush1.bf16.msra.mxu0 %v470
        %869 = vmatprep.subr.bf16.mxu0 0
        %870 = vmatpush1.bf16.msra.mxu0 %v473
        %871 = vmatprep.subr.bf16.mxu0 0
        %872 = vmatpush1.bf16.msra.mxu0 %v476
        %873 = vmatprep.subr.bf16.mxu0 0
        %874 = vmatpush1.bf16.msra.mxu0 %v479
        %875 = vmatprep.subr.bf16.mxu0 0
        %876 = vmatpush1.bf16.msra.mxu0 %v482
        %877 = vmatprep.subr.bf16.mxu0 0
        %878 = vmatpush1.bf16.msra.mxu0 %v485
        %879 = vmatprep.subr.bf16.mxu0 0
        %880 = vmatpush1.bf16.msra.mxu0 0
        %881 = vmatprep.subr.bf16.mxu0 0
        %882 = vmatpush1.bf16.msra.mxu0 0
        %883 = vmatprep.subr.bf16.mxu0 0
        %884 = vmatpush1.bf16.msra.mxu0 0
        %885 = vmatprep.subr.bf16.mxu0 0
        %886 = vmatpush1.bf16.msra.mxu0 0
        %887 = vmatprep.subr.bf16.mxu0 0
        %888 = vmatpush1.bf16.msra.mxu0 0
        %889 = vmatprep.subr.bf16.mxu0 0
        %890 = vmatpush1.bf16.msra.mxu0 0
        %891 = vmatprep.subr.bf16.mxu0 0
        %892 = vmatpush1.bf16.msra.mxu0 0
        %893 = vmatprep.subr.bf16.mxu0 0
        %894 = vmatpush1.bf16.msra.mxu0 0
        %895 = vmatprep.mubr.bf16.mxu0 0
        %896 = vmatmul.mubr.bf16.gmra.mrb[0].mxu0 %v301
        %v897 = vpop.f32.mrb[0].mxu0
        %v898 = vadd.f32 %v378, %v897
        %v899 = vpop.f32.mrb[0].mxu0
        %v900 = vpop.f32.mrb[0].mxu0
        %v901 = vadd.f32 %v378, %v900
        %v902 = vpop.f32.mrb[0].mxu0
        %903 = vmatprep.mubr.bf16.mxu0 0
        %904 = vmatmul.mubr.bf16.gmra.mrb[0].mxu0 %v302
        %v905 = vpop.f32.mrb[0].mxu0
        %v906 = vadd.f32 %v378, %v905
        %v907 = vpop.f32.mrb[0].mxu0
        %v908 = vpop.f32.mrb[0].mxu0
        %v909 = vadd.f32 %v378, %v908
        %v910 = vpop.f32.mrb[0].mxu0
        %911 = vmatprep.mubr.bf16.mxu0 0
        %912 = vmatmul.mubr.bf16.gmra.mrb[0].mxu0 %v303
        %v913 = vpop.f32.mrb[0].mxu0
        %v914 = vadd.f32 %v378, %v913
        %v915 = vpop.f32.mrb[0].mxu0
        %v916 = vpop.f32.mrb[0].mxu0
        %v917 = vadd.f32 %v378, %v916
        %v918 = vpop.f32.mrb[0].mxu0
        %919 = vmatprep.mubr.bf16.mxu0 0
        %920 = vmatmul.mubr.bf16.gmra.mrb[0].mxu0 %v304
        %v921 = vpop.f32.mrb[0].mxu0
        %v922 = vadd.f32 %v378, %v921
        %v923 = vpop.f32.mrb[0].mxu0
        %v924 = vpop.f32.mrb[0].mxu0
        %v925 = vadd.f32 %v378, %v924
        %v926 = vpop.f32.mrb[0].mxu0
        %927 = vmatprep.mubr.bf16.mxu0 0
        %928 = vmatmul.mubr.bf16.gmra.mrb[0].mxu0 %v305
        %v929 = vpop.f32.mrb[0].mxu0
        %v930 = vadd.f32 %v378, %v929
        %v931 = vpop.f32.mrb[0].mxu0
        %v932 = vpop.f32.mrb[0].mxu0
        %v933 = vadd.f32 %v378, %v932
        %v934 = vpop.f32.mrb[0].mxu0
        %935 = vmatprep.mubr.bf16.mxu0 0
        %936 = vmatmul.mubr.bf16.gmra.mrb[0].mxu0 %v306
        %v937 = vpop.f32.mrb[0].mxu0
        %v938 = vadd.f32 %v378, %v937
        %v939 = vpop.f32.mrb[0].mxu0
        %v940 = vpop.f32.mrb[0].mxu0
        %v941 = vadd.f32 %v378, %v940
        %v942 = vpop.f32.mrb[0].mxu0
        %943 = vmatprep.mubr.bf16.mxu0 0
        %944 = vmatmul.mubr.bf16.gmra.mrb[0].mxu0 %v307
        %v945 = vpop.f32.mrb[0].mxu0
        %v946 = vadd.f32 %v378, %v945
        %v947 = vpop.f32.mrb[0].mxu0
        %v948 = vpop.f32.mrb[0].mxu0
        %v949 = vadd.f32 %v378, %v948
        %v950 = vpop.f32.mrb[0].mxu0
        %951 = vmatprep.mubr.bf16.mxu0 0
        %952 = vmatmul.mubr.bf16.gmra.mrb[0].mxu0 %v308
        %v953 = vpop.f32.mrb[0].mxu0
        %v954 = vadd.f32 %v378, %v953
        %v955 = vpop.f32.mrb[0].mxu0
        %v956 = vpop.f32.mrb[0].mxu0
        %v957 = vadd.f32 %v378, %v956
        %v958 = vpop.f32.mrb[0].mxu0
        %959 = vmatprep.mubr.bf16.mxu0 0
        %960 = vmatmul.mubr.bf16.gmra.mrb[0].mxu0 %v309
        %v961 = vpop.f32.mrb[0].mxu0
        %v962 = vadd.f32 %v378, %v961
        %v963 = vpop.f32.mrb[0].mxu0
        %v964 = vpop.f32.mrb[0].mxu0
        %v965 = vadd.f32 %v378, %v964
        %v966 = vpop.f32.mrb[0].mxu0
        %967 = vmatprep.mubr.bf16.mxu0 0
        %968 = vmatmul.mubr.bf16.gmra.mrb[0].mxu0 %v310
        %v969 = vpop.f32.mrb[0].mxu0
        %v970 = vadd.f32 %v378, %v969
        %v971 = vpop.f32.mrb[0].mxu0
        %v972 = vpop.f32.mrb[0].mxu0
        %v973 = vadd.f32 %v378, %v972
        %v974 = vpop.f32.mrb[0].mxu0
        %975 = vmatprep.mubr.bf16.mxu0 0
        %976 = vmatmul.mubr.bf16.gmra.mrb[0].mxu0 %v311
        %v977 = vpop.f32.mrb[0].mxu0
        %v978 = vadd.f32 %v378, %v977
        %v979 = vpop.f32.mrb[0].mxu0
        %v980 = vpop.f32.mrb[0].mxu0
        %v981 = vadd.f32 %v378, %v980
        %v982 = vpop.f32.mrb[0].mxu0
        %983 = vmatprep.mubr.bf16.mxu0 0
        %984 = vmatmul.mubr.bf16.gmra.mrb[0].mxu0 %v312
        %v985 = vpop.f32.mrb[0].mxu0
        %v986 = vadd.f32 %v378, %v985
        %v987 = vpop.f32.mrb[0].mxu0
        %v988 = vpop.f32.mrb[0].mxu0
        %v989 = vadd.f32 %v378, %v988
        %v990 = vpop.f32.mrb[0].mxu0
        %991 = vmatprep.mubr.bf16.mxu0 0
        %992 = vmatmul.mubr.bf16.gmra.mrb[0].mxu0 %v313
        %v993 = vpop.f32.mrb[0].mxu0
        %v994 = vadd.f32 %v378, %v993
        %v995 = vpop.f32.mrb[0].mxu0
        %v996 = vpop.f32.mrb[0].mxu0
        %v997 = vadd.f32 %v378, %v996
        %v998 = vpop.f32.mrb[0].mxu0
        %999 = vmatprep.mubr.bf16.mxu0 0
        %1000 = vmatmul.mubr.bf16.gmra.mrb[0].mxu0 %v314
        %v1001 = vpop.f32.mrb[0].mxu0
        %v1002 = vadd.f32 %v378, %v1001
        %v1003 = vpop.f32.mrb[0].mxu0
        %v1004 = vpop.f32.mrb[0].mxu0
        %v1005 = vadd.f32 %v378, %v1004
        %v1006 = vpop.f32.mrb[0].mxu0
        %1007 = vmatprep.mubr.bf16.mxu0 0
        %1008 = vmatmul.mubr.bf16.gmra.mrb[0].mxu0 %v315
        %v1009 = vpop.f32.mrb[0].mxu0
        %v1010 = vadd.f32 %v378, %v1009
        %v1011 = vpop.f32.mrb[0].mxu0
        %v1012 = vpop.f32.mrb[0].mxu0
        %v1013 = vadd.f32 %v378, %v1012
        %v1014 = vpop.f32.mrb[0].mxu0
        %1015 = vmatprep.mubr.bf16.mxu0 0
        %1016 = vmatmul.mubr.bf16.gmra.mrb[0].mxu0 %v316
        %v1017 = vpop.f32.mrb[0].mxu0
        %v1018 = vadd.f32 %v378, %v1017
        %v1019 = vpop.f32.mrb[0].mxu0
        %v1020 = vpop.f32.mrb[0].mxu0
        %v1021 = vadd.f32 %v378, %v1020
        %v1022 = vpop.f32.mrb[0].mxu0
        %1023 = vmatprep.mubr.bf16.mxu0 0
        %1024 = vmatmul.mubr.bf16.gmra.mrb[0].mxu0 %v317
        %v1025 = vpop.f32.mrb[0].mxu0
        %v1026 = vadd.f32 %v378, %v1025
        %v1027 = vpop.f32.mrb[0].mxu0
        %v1028 = vpop.f32.mrb[0].mxu0
        %v1029 = vadd.f32 %v378, %v1028
        %v1030 = vpop.f32.mrb[0].mxu0
        %1031 = vmatprep.mubr.bf16.mxu0 0
        %1032 = vmatmul.mubr.bf16.gmra.mrb[0].mxu0 %v318
        %v1033 = vpop.f32.mrb[0].mxu0
        %v1034 = vadd.f32 %v378, %v1033
        %v1035 = vpop.f32.mrb[0].mxu0
        %v1036 = vpop.f32.mrb[0].mxu0
        %v1037 = vadd.f32 %v378, %v1036
        %v1038 = vpop.f32.mrb[0].mxu0
        %1039 = vmatprep.mubr.bf16.mxu0 0
        %1040 = vmatmul.mubr.bf16.gmra.mrb[0].mxu0 %v319
        %v1041 = vpop.f32.mrb[0].mxu0
        %v1042 = vadd.f32 %v378, %v1041
        %v1043 = vpop.f32.mrb[0].mxu0
        %v1044 = vpop.f32.mrb[0].mxu0
        %v1045 = vadd.f32 %v378, %v1044
        %v1046 = vpop.f32.mrb[0].mxu0
        %1047 = vmatprep.mubr.bf16.mxu0 0
        %1048 = vmatmul.mubr.bf16.gmra.mrb[0].mxu0 %v320
        %v1049 = vpop.f32.mrb[0].mxu0
        %v1050 = vadd.f32 %v378, %v1049
        %v1051 = vpop.f32.mrb[0].mxu0
        %v1052 = vpop.f32.mrb[0].mxu0
        %v1053 = vadd.f32 %v378, %v1052
        %v1054 = vpop.f32.mrb[0].mxu0
        %1055 = vmatprep.mubr.bf16.mxu0 0
        %1056 = vmatmul.mubr.bf16.gmra.mrb[0].mxu0 %v321
        %v1057 = vpop.f32.mrb[0].mxu0
        %v1058 = vadd.f32 %v378, %v1057
        %v1059 = vpop.f32.mrb[0].mxu0
        %v1060 = vpop.f32.mrb[0].mxu0
        %v1061 = vadd.f32 %v378, %v1060
        %v1062 = vpop.f32.mrb[0].mxu0
        %1063 = vmatprep.mubr.bf16.mxu0 0
        %1064 = vmatmul.mubr.bf16.gmra.mrb[0].mxu0 %v322
        %v1065 = vpop.f32.mrb[0].mxu0
        %v1066 = vadd.f32 %v378, %v1065
        %v1067 = vpop.f32.mrb[0].mxu0
        %v1068 = vpop.f32.mrb[0].mxu0
        %v1069 = vadd.f32 %v378, %v1068
        %v1070 = vpop.f32.mrb[0].mxu0
        %1071 = vmatprep.mubr.bf16.mxu0 0
        %1072 = vmatmul.mubr.bf16.gmra.mrb[0].mxu0 %v323
        %v1073 = vpop.f32.mrb[0].mxu0
        %v1074 = vadd.f32 %v378, %v1073
        %v1075 = vpop.f32.mrb[0].mxu0
        %v1076 = vpop.f32.mrb[0].mxu0
        %v1077 = vadd.f32 %v378, %v1076
        %v1078 = vpop.f32.mrb[0].mxu0
        %1079 = vmatprep.mubr.bf16.mxu0 0
        %1080 = vmatmul.mubr.bf16.gmra.mrb[0].mxu0 %v324
        %v1081 = vpop.f32.mrb[0].mxu0
        %v1082 = vadd.f32 %v378, %v1081
        %v1083 = vpop.f32.mrb[0].mxu0
        %v1084 = vpop.f32.mrb[0].mxu0
        %v1085 = vadd.f32 %v378, %v1084
        %v1086 = vpop.f32.mrb[0].mxu0
        %1087 = vmatprep.mubr.bf16.mxu0 0
        %1088 = vmatmul.mubr.bf16.gmra.mrb[0].mxu0 %v325
        %v1089 = vpop.f32.mrb[0].mxu0
        %v1090 = vadd.f32 %v378, %v1089
        %v1091 = vpop.f32.mrb[0].mxu0
        %v1092 = vpop.f32.mrb[0].mxu0
        %v1093 = vadd.f32 %v378, %v1092
        %v1094 = vpop.f32.mrb[0].mxu0
        %1095 = vmatprep.mubr.bf16.mxu0 0
        %1096 = vmatmul.mubr.bf16.gmra.mrb[0].mxu0 %v326
        %v1097 = vpop.f32.mrb[0].mxu0
        %v1098 = vadd.f32 %v378, %v1097
        %v1099 = vpop.f32.mrb[0].mxu0
        %v1100 = vpop.f32.mrb[0].mxu0
        %v1101 = vadd.f32 %v378, %v1100
        %v1102 = vpop.f32.mrb[0].mxu0
        %1103 = vmatprep.mubr.bf16.mxu0 0
        %1104 = vmatmul.mubr.bf16.gmra.mrb[0].mxu0 %v327
        %v1105 = vpop.f32.mrb[0].mxu0
        %v1106 = vadd.f32 %v378, %v1105
        %v1107 = vpop.f32.mrb[0].mxu0
        %v1108 = vpop.f32.mrb[0].mxu0
        %v1109 = vadd.f32 %v378, %v1108
        %v1110 = vpop.f32.mrb[0].mxu0
        %1111 = vmatprep.mubr.bf16.mxu0 0
        %1112 = vmatmul.mubr.bf16.gmra.mrb[0].mxu0 %v328
        %v1113 = vpop.f32.mrb[0].mxu0
        %v1114 = vadd.f32 %v378, %v1113
        %v1115 = vpop.f32.mrb[0].mxu0
        %v1116 = vpop.f32.mrb[0].mxu0
        %v1117 = vadd.f32 %v378, %v1116
        %v1118 = vpop.f32.mrb[0].mxu0
        %1119 = vmatprep.mubr.bf16.mxu0 0
        %1120 = vmatmul.mubr.bf16.gmra.mrb[0].mxu0 %v329
        %v1121 = vpop.f32.mrb[0].mxu0
        %v1122 = vadd.f32 %v378, %v1121
        %v1123 = vpop.f32.mrb[0].mxu0
        %v1124 = vpop.f32.mrb[0].mxu0
        %v1125 = vadd.f32 %v378, %v1124
        %v1126 = vpop.f32.mrb[0].mxu0
        %1127 = vmatprep.mubr.bf16.mxu0 0
        %1128 = vmatmul.mubr.bf16.gmra.mrb[0].mxu0 %v330
        %v1129 = vpop.f32.mrb[0].mxu0
        %v1130 = vadd.f32 %v378, %v1129
        %v1131 = vpop.f32.mrb[0].mxu0
        %v1132 = vpop.f32.mrb[0].mxu0
        %v1133 = vadd.f32 %v378, %v1132
        %v1134 = vpop.f32.mrb[0].mxu0
        %1135 = vmatprep.mubr.bf16.mxu0 0
        %1136 = vmatmul.mubr.bf16.gmra.mrb[0].mxu0 %v331
        %v1137 = vpop.f32.mrb[0].mxu0
        %v1138 = vadd.f32 %v378, %v1137
        %v1139 = vpop.f32.mrb[0].mxu0
        %v1140 = vpop.f32.mrb[0].mxu0
        %v1141 = vadd.f32 %v378, %v1140
        %v1142 = vpop.f32.mrb[0].mxu0
        %1143 = vmatprep.mubr.bf16.mxu0 0
        %1144 = vmatmul.mubr.bf16.gmra.mrb[0].mxu0 %v332
        %v1145 = vpop.f32.mrb[0].mxu0
        %v1146 = vadd.f32 %v378, %v1145
        %v1147 = vpop.f32.mrb[0].mxu0
        %v1148 = vpop.f32.mrb[0].mxu0
        %v1149 = vadd.f32 %v378, %v1148
        %v1150 = vpop.f32.mrb[0].mxu0
        %1151 = vdwg.mxu0
        %v1152 = vpack.c.bf16 %v549, %v545
        %v1153 = vpack.c.bf16 %v551, %v547
        %v1154 = vpack.c.bf16 %v901, %v898
        %v1155 = vpack.c.bf16 %v559, %v555
        %v1156 = vpack.c.bf16 %v561, %v557
        %v1157 = vpack.c.bf16 %v909, %v906
        %v1158 = vpack.c.bf16 %v569, %v565
        %v1159 = vpack.c.bf16 %v571, %v567
        %v1160 = vpack.c.bf16 %v917, %v914
        %v1161 = vpack.c.bf16 %v579, %v575
        %v1162 = vpack.c.bf16 %v581, %v577
        %v1163 = vpack.c.bf16 %v925, %v922
        %v1164 = vpack.c.bf16 %v589, %v585
        %v1165 = vpack.c.bf16 %v591, %v587
        %v1166 = vpack.c.bf16 %v933, %v930
        %v1167 = vpack.c.bf16 %v599, %v595
        %v1168 = vpack.c.bf16 %v601, %v597
        %v1169 = vpack.c.bf16 %v941, %v938
        %v1170 = vpack.c.bf16 %v609, %v605
        %v1171 = vpack.c.bf16 %v611, %v607
        %v1172 = vpack.c.bf16 %v949, %v946
        %v1173 = vpack.c.bf16 %v619, %v615
        %v1174 = vpack.c.bf16 %v621, %v617
        %v1175 = vpack.c.bf16 %v957, %v954
        %v1176 = vpack.c.bf16 %v629, %v625
        %v1177 = vpack.c.bf16 %v631, %v627
        %v1178 = vpack.c.bf16 %v965, %v962
        %v1179 = vpack.c.bf16 %v639, %v635
        %v1180 = vpack.c.bf16 %v641, %v637
        %v1181 = vpack.c.bf16 %v973, %v970
        %v1182 = vpack.c.bf16 %v649, %v645
        %v1183 = vpack.c.bf16 %v651, %v647
        %v1184 = vpack.c.bf16 %v981, %v978
        %v1185 = vpack.c.bf16 %v659, %v655
        %v1186 = vpack.c.bf16 %v661, %v657
        %v1187 = vpack.c.bf16 %v989, %v986
        %v1188 = vpack.c.bf16 %v669, %v665
        %v1189 = vpack.c.bf16 %v671, %v667
        %v1190 = vpack.c.bf16 %v997, %v994
        %v1191 = vpack.c.bf16 %v679, %v675
        %v1192 = vpack.c.bf16 %v681, %v677
        %v1193 = vpack.c.bf16 %v1005, %v1002
        %v1194 = vpack.c.bf16 %v689, %v685
        %v1195 = vpack.c.bf16 %v691, %v687
        %v1196 = vpack.c.bf16 %v1013, %v1010
        %v1197 = vpack.c.bf16 %v699, %v695
        %v1198 = vpack.c.bf16 %v701, %v697
        %v1199 = vpack.c.bf16 %v1021, %v1018
        %v1200 = vpack.c.bf16 %v709, %v705
        %v1201 = vpack.c.bf16 %v711, %v707
        %v1202 = vpack.c.bf16 %v1029, %v1026
        %v1203 = vpack.c.bf16 %v719, %v715
        %v1204 = vpack.c.bf16 %v721, %v717
        %v1205 = vpack.c.bf16 %v1037, %v1034
        %v1206 = vpack.c.bf16 %v729, %v725
        %v1207 = vpack.c.bf16 %v731, %v727
        %v1208 = vpack.c.bf16 %v1045, %v1042
        %v1209 = vpack.c.bf16 %v739, %v735
        %v1210 = vpack.c.bf16 %v741, %v737
        %v1211 = vpack.c.bf16 %v1053, %v1050
        %v1212 = vpack.c.bf16 %v749, %v745
        %v1213 = vpack.c.bf16 %v751, %v747
        %v1214 = vpack.c.bf16 %v1061, %v1058
        %v1215 = vpack.c.bf16 %v759, %v755
        %v1216 = vpack.c.bf16 %v761, %v757
        %v1217 = vpack.c.bf16 %v1069, %v1066
        %v1218 = vpack.c.bf16 %v769, %v765
        %v1219 = vpack.c.bf16 %v771, %v767
        %v1220 = vpack.c.bf16 %v1077, %v1074
        %v1221 = vpack.c.bf16 %v779, %v775
        %v1222 = vpack.c.bf16 %v781, %v777
        %v1223 = vpack.c.bf16 %v1085, %v1082
        %v1224 = vpack.c.bf16 %v789, %v785
        %v1225 = vpack.c.bf16 %v791, %v787
        %v1226 = vpack.c.bf16 %v1093, %v1090
        %v1227 = vpack.c.bf16 %v799, %v795
        %v1228 = vpack.c.bf16 %v801, %v797
        %v1229 = vpack.c.bf16 %v1101, %v1098
        %v1230 = vpack.c.bf16 %v809, %v805
        %v1231 = vpack.c.bf16 %v811, %v807
        %v1232 = vpack.c.bf16 %v1109, %v1106
        %v1233 = vpack.c.bf16 %v819, %v815
        %v1234 = vpack.c.bf16 %v821, %v817
        %v1235 = vpack.c.bf16 %v1117, %v1114
        %v1236 = vpack.c.bf16 %v829, %v825
        %v1237 = vpack.c.bf16 %v831, %v827
        %v1238 = vpack.c.bf16 %v1125, %v1122
        %v1239 = vpack.c.bf16 %v839, %v835
        %v1240 = vpack.c.bf16 %v841, %v837
        %v1241 = vpack.c.bf16 %v1133, %v1130
        %v1242 = vpack.c.bf16 %v849, %v845
        %v1243 = vpack.c.bf16 %v851, %v847
        %v1244 = vpack.c.bf16 %v1141, %v1138
        %v1245 = vpack.c.bf16 %v859, %v855
        %v1246 = vpack.c.bf16 %v861, %v857
        %v1247 = vpack.c.bf16 %v1149, %v1146
        %v1344 = vunpack.c.l.b16 %v1152
        %v1345 = vunpack.c.l.b16 %v1153
        %v1346 = vunpack.c.l.b16 %v1154
        %v1347 = vunpack.c.h.b16 %v1152
        %v1348 = vunpack.c.h.b16 %v1153
        %v1349 = vunpack.c.h.b16 %v1154
        %v1350 = vunpack.c.l.b16 %v1155
        %v1351 = vunpack.c.l.b16 %v1156
        %v1352 = vunpack.c.l.b16 %v1157
        %v1353 = vunpack.c.h.b16 %v1155
        %v1354 = vunpack.c.h.b16 %v1156
        %v1355 = vunpack.c.h.b16 %v1157
        %v1356 = vunpack.c.l.b16 %v1158
        %v1357 = vunpack.c.l.b16 %v1159
        %v1358 = vunpack.c.l.b16 %v1160
        %v1359 = vunpack.c.h.b16 %v1158
        %v1360 = vunpack.c.h.b16 %v1159
        %v1361 = vunpack.c.h.b16 %v1160
        %v1362 = vunpack.c.l.b16 %v1161
        %v1363 = vunpack.c.l.b16 %v1162
        %v1364 = vunpack.c.l.b16 %v1163
        %v1365 = vunpack.c.h.b16 %v1161
        %v1366 = vunpack.c.h.b16 %v1162
        %v1367 = vunpack.c.h.b16 %v1163
        %v1368 = vunpack.c.l.b16 %v1164
        %v1369 = vunpack.c.l.b16 %v1165
        %v1370 = vunpack.c.l.b16 %v1166
        %v1371 = vunpack.c.h.b16 %v1164
        %v1372 = vunpack.c.h.b16 %v1165
        %v1373 = vunpack.c.h.b16 %v1166
        %v1374 = vunpack.c.l.b16 %v1167
        %v1375 = vunpack.c.l.b16 %v1168
        %v1376 = vunpack.c.l.b16 %v1169
        %v1377 = vunpack.c.h.b16 %v1167
        %v1378 = vunpack.c.h.b16 %v1168
        %v1379 = vunpack.c.h.b16 %v1169
        %v1380 = vunpack.c.l.b16 %v1170
        %v1381 = vunpack.c.l.b16 %v1171
        %v1382 = vunpack.c.l.b16 %v1172
        %v1383 = vunpack.c.h.b16 %v1170
        %v1384 = vunpack.c.h.b16 %v1171
        %v1385 = vunpack.c.h.b16 %v1172
        %v1386 = vunpack.c.l.b16 %v1173
        %v1387 = vunpack.c.l.b16 %v1174
        %v1388 = vunpack.c.l.b16 %v1175
        %v1389 = vunpack.c.h.b16 %v1173
        %v1390 = vunpack.c.h.b16 %v1174
        %v1391 = vunpack.c.h.b16 %v1175
        %v1392 = vunpack.c.l.b16 %v1176
        %v1393 = vunpack.c.l.b16 %v1177
        %v1394 = vunpack.c.l.b16 %v1178
        %v1395 = vunpack.c.h.b16 %v1176
        %v1396 = vunpack.c.h.b16 %v1177
        %v1397 = vunpack.c.h.b16 %v1178
        %v1398 = vunpack.c.l.b16 %v1179
        %v1399 = vunpack.c.l.b16 %v1180
        %v1400 = vunpack.c.l.b16 %v1181
        %v1401 = vunpack.c.h.b16 %v1179
        %v1402 = vunpack.c.h.b16 %v1180
        %v1403 = vunpack.c.h.b16 %v1181
        %v1404 = vunpack.c.l.b16 %v1182
        %v1405 = vunpack.c.l.b16 %v1183
        %v1406 = vunpack.c.l.b16 %v1184
        %v1407 = vunpack.c.h.b16 %v1182
        %v1408 = vunpack.c.h.b16 %v1183
        %v1409 = vunpack.c.h.b16 %v1184
        %v1410 = vunpack.c.l.b16 %v1185
        %v1411 = vunpack.c.l.b16 %v1186
        %v1412 = vunpack.c.l.b16 %v1187
        %v1413 = vunpack.c.h.b16 %v1185
        %v1414 = vunpack.c.h.b16 %v1186
        %v1415 = vunpack.c.h.b16 %v1187
        %v1416 = vunpack.c.l.b16 %v1188
        %v1417 = vunpack.c.l.b16 %v1189
        %v1418 = vunpack.c.l.b16 %v1190
        %v1419 = vunpack.c.h.b16 %v1188
        %v1420 = vunpack.c.h.b16 %v1189
        %v1421 = vunpack.c.h.b16 %v1190
        %v1422 = vunpack.c.l.b16 %v1191
        %v1423 = vunpack.c.l.b16 %v1192
        %v1424 = vunpack.c.l.b16 %v1193
        %v1425 = vunpack.c.h.b16 %v1191
        %v1426 = vunpack.c.h.b16 %v1192
        %v1427 = vunpack.c.h.b16 %v1193
        %v1428 = vunpack.c.l.b16 %v1194
        %v1429 = vunpack.c.l.b16 %v1195
        %v1430 = vunpack.c.l.b16 %v1196
        %v1431 = vunpack.c.h.b16 %v1194
        %v1432 = vunpack.c.h.b16 %v1195
        %v1433 = vunpack.c.h.b16 %v1196
        %v1434 = vunpack.c.l.b16 %v1197
        %v1435 = vunpack.c.l.b16 %v1198
        %v1436 = vunpack.c.l.b16 %v1199
        %v1437 = vunpack.c.h.b16 %v1197
        %v1438 = vunpack.c.h.b16 %v1198
        %v1439 = vunpack.c.h.b16 %v1199
        %v1440 = vunpack.c.l.b16 %v1200
        %v1441 = vunpack.c.l.b16 %v1201
        %v1442 = vunpack.c.l.b16 %v1202
        %v1443 = vunpack.c.h.b16 %v1200
        %v1444 = vunpack.c.h.b16 %v1201
        %v1445 = vunpack.c.h.b16 %v1202
        %v1446 = vunpack.c.l.b16 %v1203
        %v1447 = vunpack.c.l.b16 %v1204
        %v1448 = vunpack.c.l.b16 %v1205
        %v1449 = vunpack.c.h.b16 %v1203
        %v1450 = vunpack.c.h.b16 %v1204
        %v1451 = vunpack.c.h.b16 %v1205
        %v1452 = vunpack.c.l.b16 %v1206
        %v1453 = vunpack.c.l.b16 %v1207
        %v1454 = vunpack.c.l.b16 %v1208
        %v1455 = vunpack.c.h.b16 %v1206
        %v1456 = vunpack.c.h.b16 %v1207
        %v1457 = vunpack.c.h.b16 %v1208
        %v1458 = vunpack.c.l.b16 %v1209
        %v1459 = vunpack.c.l.b16 %v1210
        %v1460 = vunpack.c.l.b16 %v1211
        %v1461 = vunpack.c.h.b16 %v1209
        %v1462 = vunpack.c.h.b16 %v1210
        %v1463 = vunpack.c.h.b16 %v1211
        %v1464 = vunpack.c.l.b16 %v1212
        %v1465 = vunpack.c.l.b16 %v1213
        %v1466 = vunpack.c.l.b16 %v1214
        %v1467 = vunpack.c.h.b16 %v1212
        %v1468 = vunpack.c.h.b16 %v1213
        %v1469 = vunpack.c.h.b16 %v1214
        %v1470 = vunpack.c.l.b16 %v1215
        %v1471 = vunpack.c.l.b16 %v1216
        %v1472 = vunpack.c.l.b16 %v1217
        %v1473 = vunpack.c.h.b16 %v1215
        %v1474 = vunpack.c.h.b16 %v1216
        %v1475 = vunpack.c.h.b16 %v1217
        %v1476 = vunpack.c.l.b16 %v1218
        %v1477 = vunpack.c.l.b16 %v1219
        %v1478 = vunpack.c.l.b16 %v1220
        %v1479 = vunpack.c.h.b16 %v1218
        %v1480 = vunpack.c.h.b16 %v1219
        %v1481 = vunpack.c.h.b16 %v1220
        %v1482 = vunpack.c.l.b16 %v1221
        %v1483 = vunpack.c.l.b16 %v1222
        %v1484 = vunpack.c.l.b16 %v1223
        %v1485 = vunpack.c.h.b16 %v1221
        %v1486 = vunpack.c.h.b16 %v1222
        %v1487 = vunpack.c.h.b16 %v1223
        %v1488 = vunpack.c.l.b16 %v1224
        %v1489 = vunpack.c.l.b16 %v1225
        %v1490 = vunpack.c.l.b16 %v1226
        %v1491 = vunpack.c.h.b16 %v1224
        %v1492 = vunpack.c.h.b16 %v1225
        %v1493 = vunpack.c.h.b16 %v1226
        %v1494 = vunpack.c.l.b16 %v1227
        %v1495 = vunpack.c.l.b16 %v1228
        %v1496 = vunpack.c.l.b16 %v1229
        %v1497 = vunpack.c.h.b16 %v1227
        %v1498 = vunpack.c.h.b16 %v1228
        %v1499 = vunpack.c.h.b16 %v1229
        %v1500 = vunpack.c.l.b16 %v1230
        %v1501 = vunpack.c.l.b16 %v1231
        %v1502 = vunpack.c.l.b16 %v1232
        %v1503 = vunpack.c.h.b16 %v1230
        %v1504 = vunpack.c.h.b16 %v1231
        %v1505 = vunpack.c.h.b16 %v1232
        %v1506 = vunpack.c.l.b16 %v1233
        %v1507 = vunpack.c.l.b16 %v1234
        %v1508 = vunpack.c.l.b16 %v1235
        %v1509 = vunpack.c.h.b16 %v1233
        %v1510 = vunpack.c.h.b16 %v1234
        %v1511 = vunpack.c.h.b16 %v1235
        %v1512 = vunpack.c.l.b16 %v1236
        %v1513 = vunpack.c.l.b16 %v1237
        %v1514 = vunpack.c.l.b16 %v1238
        %v1515 = vunpack.c.h.b16 %v1236
        %v1516 = vunpack.c.h.b16 %v1237
        %v1517 = vunpack.c.h.b16 %v1238
        %v1518 = vunpack.c.l.b16 %v1239
        %v1519 = vunpack.c.l.b16 %v1240
        %v1520 = vunpack.c.l.b16 %v1241
        %v1521 = vunpack.c.h.b16 %v1239
        %v1522 = vunpack.c.h.b16 %v1240
        %v1523 = vunpack.c.h.b16 %v1241
        %v1524 = vunpack.c.l.b16 %v1242
        %v1525 = vunpack.c.l.b16 %v1243
        %v1526 = vunpack.c.l.b16 %v1244
        %v1527 = vunpack.c.h.b16 %v1242
        %v1528 = vunpack.c.h.b16 %v1243
        %v1529 = vunpack.c.h.b16 %v1244
        %v1530 = vunpack.c.l.b16 %v1245
        %v1531 = vunpack.c.l.b16 %v1246
        %v1532 = vunpack.c.l.b16 %v1247
        %v1533 = vunpack.c.h.b16 %v1245
        %v1534 = vunpack.c.h.b16 %v1246
        %v1535 = vunpack.c.h.b16 %v1247
        %v1536 = vpack.c.b16 %v1345, %v1344
        %v1537 = vpack.c.b16 %v1346, %v1346
        %v1538 = vpack.c.b16 %v1348, %v1347
        %v1539 = vpack.c.b16 %v1349, %v1349
        %v1540 = vpack.c.b16 %v1351, %v1350
        %v1541 = vpack.c.b16 %v1352, %v1352
        %v1542 = vpack.c.b16 %v1354, %v1353
        %v1543 = vpack.c.b16 %v1355, %v1355
        %v1544 = vpack.c.b16 %v1357, %v1356
        %v1545 = vpack.c.b16 %v1358, %v1358
        %v1546 = vpack.c.b16 %v1360, %v1359
        %v1547 = vpack.c.b16 %v1361, %v1361
        %v1548 = vpack.c.b16 %v1363, %v1362
        %v1549 = vpack.c.b16 %v1364, %v1364
        %v1550 = vpack.c.b16 %v1366, %v1365
        %v1551 = vpack.c.b16 %v1367, %v1367
        %v1552 = vpack.c.b16 %v1369, %v1368
        %v1553 = vpack.c.b16 %v1370, %v1370
        %v1554 = vpack.c.b16 %v1372, %v1371
        %v1555 = vpack.c.b16 %v1373, %v1373
        %v1556 = vpack.c.b16 %v1375, %v1374
        %v1557 = vpack.c.b16 %v1376, %v1376
        %v1558 = vpack.c.b16 %v1378, %v1377
        %v1559 = vpack.c.b16 %v1379, %v1379
        %v1560 = vpack.c.b16 %v1381, %v1380
        %v1561 = vpack.c.b16 %v1382, %v1382
        %v1562 = vpack.c.b16 %v1384, %v1383
        %v1563 = vpack.c.b16 %v1385, %v1385
        %v1564 = vpack.c.b16 %v1387, %v1386
        %v1565 = vpack.c.b16 %v1388, %v1388
        %v1566 = vpack.c.b16 %v1390, %v1389
        %v1567 = vpack.c.b16 %v1391, %v1391
        %v1568 = vpack.c.b16 %v1393, %v1392
        %v1569 = vpack.c.b16 %v1394, %v1394
        %v1570 = vpack.c.b16 %v1396, %v1395
        %v1571 = vpack.c.b16 %v1397, %v1397
        %v1572 = vpack.c.b16 %v1399, %v1398
        %v1573 = vpack.c.b16 %v1400, %v1400
        %v1574 = vpack.c.b16 %v1402, %v1401
        %v1575 = vpack.c.b16 %v1403, %v1403
        %v1576 = vpack.c.b16 %v1405, %v1404
        %v1577 = vpack.c.b16 %v1406, %v1406
        %v1578 = vpack.c.b16 %v1408, %v1407
        %v1579 = vpack.c.b16 %v1409, %v1409
        %v1580 = vpack.c.b16 %v1411, %v1410
        %v1581 = vpack.c.b16 %v1412, %v1412
        %v1582 = vpack.c.b16 %v1414, %v1413
        %v1583 = vpack.c.b16 %v1415, %v1415
        %v1584 = vpack.c.b16 %v1417, %v1416
        %v1585 = vpack.c.b16 %v1418, %v1418
        %v1586 = vpack.c.b16 %v1420, %v1419
        %v1587 = vpack.c.b16 %v1421, %v1421
        %v1588 = vpack.c.b16 %v1423, %v1422
        %v1589 = vpack.c.b16 %v1424, %v1424
        %v1590 = vpack.c.b16 %v1426, %v1425
        %v1591 = vpack.c.b16 %v1427, %v1427
        %v1592 = vpack.c.b16 %v1429, %v1428
        %v1593 = vpack.c.b16 %v1430, %v1430
        %v1594 = vpack.c.b16 %v1432, %v1431
        %v1595 = vpack.c.b16 %v1433, %v1433
        %v1596 = vpack.c.b16 %v1435, %v1434
        %v1597 = vpack.c.b16 %v1436, %v1436
        %v1598 = vpack.c.b16 %v1438, %v1437
        %v1599 = vpack.c.b16 %v1439, %v1439
        %v1600 = vpack.c.b16 %v1441, %v1440
        %v1601 = vpack.c.b16 %v1442, %v1442
        %v1602 = vpack.c.b16 %v1444, %v1443
        %v1603 = vpack.c.b16 %v1445, %v1445
        %v1604 = vpack.c.b16 %v1447, %v1446
        %v1605 = vpack.c.b16 %v1448, %v1448
        %v1606 = vpack.c.b16 %v1450, %v1449
        %v1607 = vpack.c.b16 %v1451, %v1451
        %v1608 = vpack.c.b16 %v1453, %v1452
        %v1609 = vpack.c.b16 %v1454, %v1454
        %v1610 = vpack.c.b16 %v1456, %v1455
        %v1611 = vpack.c.b16 %v1457, %v1457
        %v1612 = vpack.c.b16 %v1459, %v1458
        %v1613 = vpack.c.b16 %v1460, %v1460
        %v1614 = vpack.c.b16 %v1462, %v1461
        %v1615 = vpack.c.b16 %v1463, %v1463
        %v1616 = vpack.c.b16 %v1465, %v1464
        %v1617 = vpack.c.b16 %v1466, %v1466
        %v1618 = vpack.c.b16 %v1468, %v1467
        %v1619 = vpack.c.b16 %v1469, %v1469
        %v1620 = vpack.c.b16 %v1471, %v1470
        %v1621 = vpack.c.b16 %v1472, %v1472
        %v1622 = vpack.c.b16 %v1474, %v1473
        %v1623 = vpack.c.b16 %v1475, %v1475
        %v1624 = vpack.c.b16 %v1477, %v1476
        %v1625 = vpack.c.b16 %v1478, %v1478
        %v1626 = vpack.c.b16 %v1480, %v1479
        %v1627 = vpack.c.b16 %v1481, %v1481
        %v1628 = vpack.c.b16 %v1483, %v1482
        %v1629 = vpack.c.b16 %v1484, %v1484
        %v1630 = vpack.c.b16 %v1486, %v1485
        %v1631 = vpack.c.b16 %v1487, %v1487
        %v1632 = vpack.c.b16 %v1489, %v1488
        %v1633 = vpack.c.b16 %v1490, %v1490
        %v1634 = vpack.c.b16 %v1492, %v1491
        %v1635 = vpack.c.b16 %v1493, %v1493
        %v1636 = vpack.c.b16 %v1495, %v1494
        %v1637 = vpack.c.b16 %v1496, %v1496
        %v1638 = vpack.c.b16 %v1498, %v1497
        %v1639 = vpack.c.b16 %v1499, %v1499
        %v1640 = vpack.c.b16 %v1501, %v1500
        %v1641 = vpack.c.b16 %v1502, %v1502
        %v1642 = vpack.c.b16 %v1504, %v1503
        %v1643 = vpack.c.b16 %v1505, %v1505
        %v1644 = vpack.c.b16 %v1507, %v1506
        %v1645 = vpack.c.b16 %v1508, %v1508
        %v1646 = vpack.c.b16 %v1510, %v1509
        %v1647 = vpack.c.b16 %v1511, %v1511
        %v1648 = vpack.c.b16 %v1513, %v1512
        %v1649 = vpack.c.b16 %v1514, %v1514
        %v1650 = vpack.c.b16 %v1516, %v1515
        %v1651 = vpack.c.b16 %v1517, %v1517
        %v1652 = vpack.c.b16 %v1519, %v1518
        %v1653 = vpack.c.b16 %v1520, %v1520
        %v1654 = vpack.c.b16 %v1522, %v1521
        %v1655 = vpack.c.b16 %v1523, %v1523
        %v1656 = vpack.c.b16 %v1525, %v1524
        %v1657 = vpack.c.b16 %v1526, %v1526
        %v1658 = vpack.c.b16 %v1528, %v1527
        %v1659 = vpack.c.b16 %v1529, %v1529
        %v1660 = vpack.c.b16 %v1531, %v1530
        %v1661 = vpack.c.b16 %v1532, %v1532
        %v1662 = vpack.c.b16 %v1534, %v1533
        %v1663 = vpack.c.b16 %v1535, %v1535
        %1792 = vst [vmem:[%s233] sm:$0xff] %v1536
        %1793 = vst [vmem:[%s233 + $0x8] sm:$0xf] %v1537
        %1794 = vst [vmem:[%s233 + $0xc] sm:$0xff] %v1538
        %1795 = vst [vmem:[%s233 + $0x14] sm:$0xf] %v1539
        %1796 = vst [vmem:[%s233 + $0x18] sm:$0xff] %v1540
        %1797 = vst [vmem:[%s233 + $0x20] sm:$0xf] %v1541
        %1798 = vst [vmem:[%s233 + $0x24] sm:$0xff] %v1542
        %1799 = vst [vmem:[%s233 + $0x2c] sm:$0xf] %v1543
        %1800 = vst [vmem:[%s233 + $0x30] sm:$0xff] %v1544
        %1801 = vst [vmem:[%s233 + $0x38] sm:$0xf] %v1545
        %1802 = vst [vmem:[%s233 + $0x3c] sm:$0xff] %v1546
        %1803 = vst [vmem:[%s233 + $0x44] sm:$0xf] %v1547
        %1804 = vst [vmem:[%s233 + $0x48] sm:$0xff] %v1548
        %1805 = vst [vmem:[%s233 + $0x50] sm:$0xf] %v1549
        %1806 = vst [vmem:[%s233 + $0x54] sm:$0xff] %v1550
        %1807 = vst [vmem:[%s233 + $0x5c] sm:$0xf] %v1551
        %1808 = vst [vmem:[%s233 + $0x60] sm:$0xff] %v1552
        %1809 = vst [vmem:[%s233 + $0x68] sm:$0xf] %v1553
        %1810 = vst [vmem:[%s233 + $0x6c] sm:$0xff] %v1554
        %1811 = vst [vmem:[%s233 + $0x74] sm:$0xf] %v1555
        %1812 = vst [vmem:[%s233 + $0x78] sm:$0xff] %v1556
        %1813 = vst [vmem:[%s233 + $0x80] sm:$0xf] %v1557
        %1814 = vst [vmem:[%s233 + $0x84] sm:$0xff] %v1558
        %1815 = vst [vmem:[%s233 + $0x8c] sm:$0xf] %v1559
        %1816 = vst [vmem:[%s233 + $0x90] sm:$0xff] %v1560
        %1817 = vst [vmem:[%s233 + $0x98] sm:$0xf] %v1561
        %1818 = vst [vmem:[%s233 + $0x9c] sm:$0xff] %v1562
        %1819 = vst [vmem:[%s233 + $0xa4] sm:$0xf] %v1563
        %1820 = vst [vmem:[%s233 + $0xa8] sm:$0xff] %v1564
        %1821 = vst [vmem:[%s233 + $0xb0] sm:$0xf] %v1565
        %1822 = vst [vmem:[%s233 + $0xb4] sm:$0xff] %v1566
        %1823 = vst [vmem:[%s233 + $0xbc] sm:$0xf] %v1567
        %1824 = vst [vmem:[%s233 + $0xc0] sm:$0xff] %v1568
        %1825 = vst [vmem:[%s233 + $0xc8] sm:$0xf] %v1569
        %1826 = vst [vmem:[%s233 + $0xcc] sm:$0xff] %v1570
        %1827 = vst [vmem:[%s233 + $0xd4] sm:$0xf] %v1571
        %1828 = vst [vmem:[%s233 + $0xd8] sm:$0xff] %v1572
        %1829 = vst [vmem:[%s233 + $0xe0] sm:$0xf] %v1573
        %1830 = vst [vmem:[%s233 + $0xe4] sm:$0xff] %v1574
        %1831 = vst [vmem:[%s233 + $0xec] sm:$0xf] %v1575
        %1832 = vst [vmem:[%s233 + $0xf0] sm:$0xff] %v1576
        %1833 = vst [vmem:[%s233 + $0xf8] sm:$0xf] %v1577
        %1834 = vst [vmem:[%s233 + $0xfc] sm:$0xff] %v1578
        %1835 = vst [vmem:[%s233 + $0x104] sm:$0xf] %v1579
        %1836 = vst [vmem:[%s233 + $0x108] sm:$0xff] %v1580
        %1837 = vst [vmem:[%s233 + $0x110] sm:$0xf] %v1581
        %1838 = vst [vmem:[%s233 + $0x114] sm:$0xff] %v1582
        %1839 = vst [vmem:[%s233 + $0x11c] sm:$0xf] %v1583
        %1840 = vst [vmem:[%s233 + $0x120] sm:$0xff] %v1584
        %1841 = vst [vmem:[%s233 + $0x128] sm:$0xf] %v1585
        %1842 = vst [vmem:[%s233 + $0x12c] sm:$0xff] %v1586
        %1843 = vst [vmem:[%s233 + $0x134] sm:$0xf] %v1587
        %1844 = vst [vmem:[%s233 + $0x138] sm:$0xff] %v1588
        %1845 = vst [vmem:[%s233 + $0x140] sm:$0xf] %v1589
        %1846 = vst [vmem:[%s233 + $0x144] sm:$0xff] %v1590
        %1847 = vst [vmem:[%s233 + $0x14c] sm:$0xf] %v1591
        %1848 = vst [vmem:[%s233 + $0x150] sm:$0xff] %v1592
        %1849 = vst [vmem:[%s233 + $0x158] sm:$0xf] %v1593
        %1850 = vst [vmem:[%s233 + $0x15c] sm:$0xff] %v1594
        %1851 = vst [vmem:[%s233 + $0x164] sm:$0xf] %v1595
        %1852 = vst [vmem:[%s233 + $0x168] sm:$0xff] %v1596
        %1853 = vst [vmem:[%s233 + $0x170] sm:$0xf] %v1597
        %1854 = vst [vmem:[%s233 + $0x174] sm:$0xff] %v1598
        %1855 = vst [vmem:[%s233 + $0x17c] sm:$0xf] %v1599
        %1856 = vst [vmem:[%s233 + $0x180] sm:$0xff] %v1600
        %1857 = vst [vmem:[%s233 + $0x188] sm:$0xf] %v1601
        %1858 = vst [vmem:[%s233 + $0x18c] sm:$0xff] %v1602
        %1859 = vst [vmem:[%s233 + $0x194] sm:$0xf] %v1603
        %1860 = vst [vmem:[%s233 + $0x198] sm:$0xff] %v1604
        %1861 = vst [vmem:[%s233 + $0x1a0] sm:$0xf] %v1605
        %1862 = vst [vmem:[%s233 + $0x1a4] sm:$0xff] %v1606
        %1863 = vst [vmem:[%s233 + $0x1ac] sm:$0xf] %v1607
        %1864 = vst [vmem:[%s233 + $0x1b0] sm:$0xff] %v1608
        %1865 = vst [vmem:[%s233 + $0x1b8] sm:$0xf] %v1609
        %1866 = vst [vmem:[%s233 + $0x1bc] sm:$0xff] %v1610
        %1867 = vst [vmem:[%s233 + $0x1c4] sm:$0xf] %v1611
        %1868 = vst [vmem:[%s233 + $0x1c8] sm:$0xff] %v1612
        %1869 = vst [vmem:[%s233 + $0x1d0] sm:$0xf] %v1613
        %1870 = vst [vmem:[%s233 + $0x1d4] sm:$0xff] %v1614
        %1871 = vst [vmem:[%s233 + $0x1dc] sm:$0xf] %v1615
        %1872 = vst [vmem:[%s233 + $0x1e0] sm:$0xff] %v1616
        %1873 = vst [vmem:[%s233 + $0x1e8] sm:$0xf] %v1617
        %1874 = vst [vmem:[%s233 + $0x1ec] sm:$0xff] %v1618
        %1875 = vst [vmem:[%s233 + $0x1f4] sm:$0xf] %v1619
        %1876 = vst [vmem:[%s233 + $0x1f8] sm:$0xff] %v1620
        %1877 = vst [vmem:[%s233 + $0x200] sm:$0xf] %v1621
        %1878 = vst [vmem:[%s233 + $0x204] sm:$0xff] %v1622
        %1879 = vst [vmem:[%s233 + $0x20c] sm:$0xf] %v1623
        %1880 = vst [vmem:[%s233 + $0x210] sm:$0xff] %v1624
        %1881 = vst [vmem:[%s233 + $0x218] sm:$0xf] %v1625
        %1882 = vst [vmem:[%s233 + $0x21c] sm:$0xff] %v1626
        %1883 = vst [vmem:[%s233 + $0x224] sm:$0xf] %v1627
        %1884 = vst [vmem:[%s233 + $0x228] sm:$0xff] %v1628
        %1885 = vst [vmem:[%s233 + $0x230] sm:$0xf] %v1629
        %1886 = vst [vmem:[%s233 + $0x234] sm:$0xff] %v1630
        %1887 = vst [vmem:[%s233 + $0x23c] sm:$0xf] %v1631
        %1888 = vst [vmem:[%s233 + $0x240] sm:$0xff] %v1632
        %1889 = vst [vmem:[%s233 + $0x248] sm:$0xf] %v1633
        %1890 = vst [vmem:[%s233 + $0x24c] sm:$0xff] %v1634
        %1891 = vst [vmem:[%s233 + $0x254] sm:$0xf] %v1635
        %1892 = vst [vmem:[%s233 + $0x258] sm:$0xff] %v1636
        %1893 = vst [vmem:[%s233 + $0x260] sm:$0xf] %v1637
        %1894 = vst [vmem:[%s233 + $0x264] sm:$0xff] %v1638
        %1895 = vst [vmem:[%s233 + $0x26c] sm:$0xf] %v1639
        %1896 = vst [vmem:[%s233 + $0x270] sm:$0xff] %v1640
        %1897 = vst [vmem:[%s233 + $0x278] sm:$0xf] %v1641
        %1898 = vst [vmem:[%s233 + $0x27c] sm:$0xff] %v1642
        %1899 = vst [vmem:[%s233 + $0x284] sm:$0xf] %v1643
        %1900 = vst [vmem:[%s233 + $0x288] sm:$0xff] %v1644
        %1901 = vst [vmem:[%s233 + $0x290] sm:$0xf] %v1645
        %1902 = vst [vmem:[%s233 + $0x294] sm:$0xff] %v1646
        %1903 = vst [vmem:[%s233 + $0x29c] sm:$0xf] %v1647
        %1904 = vst [vmem:[%s233 + $0x2a0] sm:$0xff] %v1648
        %1905 = vst [vmem:[%s233 + $0x2a8] sm:$0xf] %v1649
        %1906 = vst [vmem:[%s233 + $0x2ac] sm:$0xff] %v1650
        %1907 = vst [vmem:[%s233 + $0x2b4] sm:$0xf] %v1651
        %1908 = vst [vmem:[%s233 + $0x2b8] sm:$0xff] %v1652
        %1909 = vst [vmem:[%s233 + $0x2c0] sm:$0xf] %v1653
        %1910 = vst [vmem:[%s233 + $0x2c4] sm:$0xff] %v1654
        %1911 = vst [vmem:[%s233 + $0x2cc] sm:$0xf] %v1655
        %1912 = vst [vmem:[%s233 + $0x2d0] sm:$0xff] %v1656
        %1913 = vst [vmem:[%s233 + $0x2d8] sm:$0xf] %v1657
        %1914 = vst [vmem:[%s233 + $0x2dc] sm:$0xff] %v1658
        %1915 = vst [vmem:[%s233 + $0x2e4] sm:$0xf] %v1659
        %1916 = vst [vmem:[%s233 + $0x2e8] sm:$0xff] %v1660
        %1917 = vst [vmem:[%s233 + $0x2f0] sm:$0xf] %v1661
        %1918 = vst [vmem:[%s233 + $0x2f4] sm:$0xff] %v1662
        %1919 = vst [vmem:[%s233 + $0x2fc] sm:$0xf] %v1663
        %s1920 = sand.u32 %s113, 1
        %s1921 = scalar_lea.sflag [#allocation4], %s1920
        %s1922 = sand.u32 %s113, 1
        %s1923 = smul.addr %s1922, 768
        %s1924 = scalar_lea.vmem [#allocation8], %s1923
        // Predicated region
        $region45: #{tpu_custom_call.1} parent=31 // pred_check
          %p1925 = pneg %p123
        $region46: #{tpu_custom_call.1} parent=31 // pred_check_branch
          %1927 = sbr.rel (%p1925) target = $region48
        $region47: #{tpu_custom_call.1} parent=31 // pred_region
          %s1928 = smul.u32 64, %s26
          %s1930 = ssub.s32 12288, 12288
          %1931 = vsyncadd %s1921, %s1930
          %s1932 = smul.addr %s1928, 3
          %s1933 = smul.addr %s25, 384
          %s1934 = sadd.s32 %s1932, %s1933
          %s1935 = smul.addr %s1934, 64
          %s1936 = scalar_lea.hbm %s3, %s1935
          %s1937 = sshll.u32 %s1924, 4
          %s1938 = int_to_ptr.vmem [resolvable:$true] %s1937
          %1943 = dma.vmem_to_hbm [thread:$0]  %s1938, 12288, %s1936, %s1921, 192, 192, 12
        $region48: #{tpu_custom_call.1} parent=31 // pred_fallthru
          _
      $region32: #{tpu_custom_call.1} parent=5 // pred_fallthru
        _
      %p1944 = scmp.le.s32.totalorder 2, %s16
      // Predicated region
      $region49: #{tpu_custom_call.1} parent=5 // pred_check
        %p1945 = pneg %p1944
      $region50: #{tpu_custom_call.1} parent=5 // pred_check_branch
        %1947 = sbr.rel (%p1945) target = $region52
      $region51: #{tpu_custom_call.1} parent=5 // pred_region
        %s1948 = ssub.s32 %s16, 2
        // Predicated region
        $region53: #{tpu_custom_call.1} parent=51 // pred_check
          %p1949 = pneg %p129
        $region54: #{tpu_custom_call.1} parent=51 // pred_check_branch
          %1951 = sbr.rel (%p1949) target = $region56
        $region55: #{tpu_custom_call.1} parent=51 // pred_region
          %s1952 = sand.u32 %s114, 1
          %s1953 = scalar_lea.sflag [#allocation4], %s1952
          %s1954 = sand.u32 %s114, 1
          %s1955 = smul.addr %s1954, 768
          %s1956 = scalar_lea.vmem [#allocation8], %s1955
          %1957 = dma.done %s1953, 12288
        $region56: #{tpu_custom_call.1} parent=51 // pred_fallthru
          _
      $region52: #{tpu_custom_call.1} parent=5 // pred_fallthru
        _
    $region6: #{tpu_custom_call.1} parent=1 // loop_footer
      %s20 = sadd.s32 1, %s16
    $region7: #{tpu_custom_call.1} parent=1 // loop_footer_branch
      %15 = sbr.rel target = $region3
    $region8: #{tpu_custom_call.1} parent=1 // loop_exit
      _
    %1958 = vsyncpa [#allocation3], 1
    %s1959 = scalar_lea.sflag [#allocation3], 1
    %1960 = vsyncpa %s1959, 1
    %1961 = vsyncpa [#allocation6], 1
    %1962 = vsyncpa [#allocation4], 1
    %s1963 = scalar_lea.sflag [#allocation4], 1
    %1964 = vsyncpa %s1963, 1

</llo_original>
